<compile_context>
chip_gen: v7x
topology: tpu7x:2x2x1
jax: 0.10.0
libtpu: 0.0.40
codegen_flags: <defaults>
</compile_context>

<pallas_src>
import functools

import jax
import jax.numpy as jnp
from jax import lax
from jax.experimental import pallas as pl
from jax.experimental.pallas import tpu as pltpu

_BN_EPS = 1e-5  # torch.nn.BatchNorm2d default


def _vmem_budget_bytes():
    """Per-generation scoped-VMEM request: ~3/4 of physical, capped at 96 MiB
    (v5e/v6e: 128 MiB physical -> 96 MiB; v7x: 64 MiB physical -> 48 MiB)."""
    try:
        cap = int(pltpu.get_tpu_info().vmem_capacity_bytes)
    except Exception:
        cap = 64 * 1024 * 1024
    return int(min(cap * 3 // 4, 96 * 1024 * 1024))


def _pick_tile(hw, per_lane_bytes, tile_budget_bytes, want_split):
    """Largest HW tile (multiple of 128 dividing hw) whose double-buffered
    working set fits the budget.  If want_split (batch < 2), keep >= 2 tiles so
    a 2-extent parallel grid axis can feed both v7x TensorCores."""
    if hw % 128 != 0:
        return hw, 1  # full-dim block is always legal
    cap = max(128, (tile_budget_bytes // max(per_lane_bytes, 1)) // 128 * 128)
    t = min(hw, cap)
    if want_split and (hw // 2) % 128 == 0:
        t = min(t, hw // 2)
    while hw % t:
        t -= 128
    nt = hw // t
    part = 2 if (want_split and nt >= 2 and nt % 2 == 0) else 1
    return t, part


# --------------------------------------------------------------------------
# Pass 1: conv_g / conv_x on the MXU; emit ag/ax and per-channel sum / sumsq.
# --------------------------------------------------------------------------
def _pass1_kernel(g_ref, x_ref, wg_ref, wx_ref, ag_ref, ax_ref, stats_ref):
    j = pl.program_id(2)

    wg = wg_ref[...]                                   # (F_int, F_g) compute dtype
    wx = wx_ref[...]                                   # (F_int, F_l)
    ag = jnp.dot(wg, g_ref[0].astype(wg.dtype),
                 preferred_element_type=jnp.float32)   # (F_int, T)
    ax = jnp.dot(wx, x_ref[0].astype(wx.dtype),
                 preferred_element_type=jnp.float32)

    ag_ref[...] = ag[None].astype(ag_ref.dtype)
    ax_ref[...] = ax[None].astype(ax_ref.dtype)

    part = jnp.concatenate(
        [jnp.sum(ag, axis=1, keepdims=True),
         jnp.sum(ag * ag, axis=1, keepdims=True),
         jnp.sum(ax, axis=1, keepdims=True),
         jnp.sum(ax * ax, axis=1, keepdims=True)], axis=1)   # (F_int, 4)

    @pl.when(j == 0)
    def _():
        stats_ref[...] = jnp.zeros_like(stats_ref)

    stats_ref[...] = stats_ref[...] + part[None, None]


# --------------------------------------------------------------------------
# Pass 2: BN(ag)+BN(ax) -> ReLU -> psi 1x1 conv; accumulate psi sum / sumsq.
# --------------------------------------------------------------------------
def _pass2_kernel(ag_ref, ax_ref, coef_ref, wpsi_ref, praw_ref, pstat_ref):
    j = pl.program_id(2)

    c = coef_ref[...]                                  # (F_int, 4) f32
    ag = ag_ref[0].astype(jnp.float32)                 # (F_int, T)
    ax = ax_ref[0].astype(jnp.float32)
    act = jnp.maximum(ag * c[:, 0:1] + ax * c[:, 1:2] + c[:, 2:3], 0.0)

    wpsi = wpsi_ref[...]                               # (1, F_int) compute dtype
    praw = jnp.dot(wpsi, act.astype(wpsi.dtype),
                   preferred_element_type=jnp.float32)  # (1, T)
    praw_ref[...] = praw[None]

    part = jnp.concatenate(
        [jnp.sum(praw, axis=1, keepdims=True),
         jnp.sum(praw * praw, axis=1, keepdims=True)], axis=1)   # (1, 2)

    @pl.when(j == 0)
    def _():
        pstat_ref[...] = jnp.zeros_like(pstat_ref)

    pstat_ref[...] = pstat_ref[...] + part[None, None]


# --------------------------------------------------------------------------
# Pass 3: psi = sigmoid(BN(psi_raw)); out = x * psi   (lane-dense store).
# --------------------------------------------------------------------------
def _pass3_kernel(pcoef_ref, x_ref, praw_ref, o_ref, *, approx_recip):
    scale = pcoef_ref[0]                               # SMEM scalars
    offset = pcoef_ref[1]
    z = praw_ref[0] * scale + offset                   # (1, T) f32
    psi = pl.reciprocal(1.0 + jnp.exp(-z), approx=approx_recip)
    out = x_ref[0].astype(jnp.float32) * psi           # (F_l, T)
    o_ref[...] = out[None].astype(o_ref.dtype)


def attention_block_forward(g_nchw, x_nchw, params,
                            compute_dtype=jnp.bfloat16):
    """Forward pass of AttentionBlock (training-mode BatchNorm batch stats).

    params (torch layouts):
      wg (F_int,F_g,1,1), bg (F_int,), gamma_g/beta_g (F_int,)
      wx (F_int,F_l,1,1), bx (F_int,), gamma_x/beta_x (F_int,)
      wpsi (1,F_int,1,1), bpsi (1,),   gamma_p/beta_p (1,)
    Conv biases feeding a training-mode BatchNorm are exactly cancelled by the
    mean subtraction, so they are accepted but never loaded by the kernels.
    """
    n, f_g, h, w = g_nchw.shape
    _, f_l, _, _ = x_nchw.shape
    f_int = params["wg"].shape[0]
    hw = h * w

    g_bytes = jnp.dtype(g_nchw.dtype).itemsize
    x_bytes = jnp.dtype(x_nchw.dtype).itemsize
    c_bytes = jnp.dtype(compute_dtype).itemsize

    vmem_limit = _vmem_budget_bytes()
    # Double-buffered bytes per HW lane of the largest pass.
    per_lane = max(
        2 * (f_g * g_bytes + f_l * x_bytes) + 4 * f_int * c_bytes,  # pass 1
        4 * f_int * c_bytes + 2 * 4,                                 # pass 2
        2 * f_l * x_bytes + 2 * 4 + 2 * f_l * x_bytes,               # pass 3
    )
    t, part = _pick_tile(hw, per_lane, vmem_limit // 2, want_split=(n < 2))
    nt = hw // t
    ntp = nt // part

    # Layout plumbing: free metadata reshape NCHW -> (N, C, HW).  No channel
    # padding, no wrapper-side dtype round trips (cast happens in-kernel).
    g3 = g_nchw.reshape(n, f_g, hw)
    x3 = x_nchw.reshape(n, f_l, hw)
    wg = params["wg"][:, :, 0, 0].astype(compute_dtype)      # (F_int, F_g)
    wx = params["wx"][:, :, 0, 0].astype(compute_dtype)      # (F_int, F_l)
    wpsi = params["wpsi"][:, :, 0, 0].astype(compute_dtype)  # (1, F_int)

    hw_idx = lambda i, p, j: (i, 0, p * ntp + j)
    cparams12 = pltpu.CompilerParams(
        dimension_semantics=("parallel", "parallel", "arbitrary"),
        vmem_limit_bytes=vmem_limit)

    # ---- pass 1: conv_g / conv_x + per-channel sum / sumsq ------------------
    ag, ax, stats = pl.pallas_call(
        _pass1_kernel,
        out_shape=(jax.ShapeDtypeStruct((n, f_int, hw), compute_dtype),
                   jax.ShapeDtypeStruct((n, f_int, hw), compute_dtype),
                   jax.ShapeDtypeStruct((n, part, f_int, 4), jnp.float32)),
        grid=(n, part, ntp),
        in_specs=[pl.BlockSpec((1, f_g, t), hw_idx),
                  pl.BlockSpec((1, f_l, t), hw_idx),
                  pl.BlockSpec((f_int, f_g), lambda i, p, j: (0, 0)),
                  pl.BlockSpec((f_int, f_l), lambda i, p, j: (0, 0))],
        out_specs=(pl.BlockSpec((1, f_int, t), hw_idx),
                   pl.BlockSpec((1, f_int, t), hw_idx),
                   pl.BlockSpec((1, 1, f_int, 4), lambda i, p, j: (i, p, 0, 0))),
        compiler_params=cparams12,
    )(g3, x3, wg, wx)

    # ---- tiny glue: fold batch stats + gamma/beta into per-channel affine ---
    cnt = jnp.float32(n * hw)
    tot = jnp.sum(stats, axis=(0, 1))                         # (F_int, 4)
    mean_g = tot[:, 0] / cnt
    var_g = jnp.maximum(tot[:, 1] / cnt - mean_g * mean_g, 0.0)
    mean_x = tot[:, 2] / cnt
    var_x = jnp.maximum(tot[:, 3] / cnt - mean_x * mean_x, 0.0)
    s_g = params["gamma_g"].astype(jnp.float32) * lax.rsqrt(var_g + _BN_EPS)
    s_x = params["gamma_x"].astype(jnp.float32) * lax.rsqrt(var_x + _BN_EPS)
    off = (params["beta_g"].astype(jnp.float32) - mean_g * s_g) \
        + (params["beta_x"].astype(jnp.float32) - mean_x * s_x)
    coef = jnp.stack([s_g, s_x, off, jnp.zeros_like(off)], axis=1)  # (F_int, 4)

    # ---- pass 2: BN + add + ReLU + psi conv; accumulate psi stats -----------
    psi_raw, pstat = pl.pallas_call(
        _pass2_kernel,
        out_shape=(jax.ShapeDtypeStruct((n, 1, hw), jnp.float32),
                   jax.ShapeDtypeStruct((n, part, 1, 2), jnp.float32)),
        grid=(n, part, ntp),
        in_specs=[pl.BlockSpec((1, f_int, t), hw_idx),
                  pl.BlockSpec((1, f_int, t), hw_idx),
                  pl.BlockSpec((f_int, 4), lambda i, p, j: (0, 0)),
                  pl.BlockSpec((1, f_int), lambda i, p, j: (0, 0))],
        out_specs=(pl.BlockSpec((1, 1, t), hw_idx),
                   pl.BlockSpec((1, 1, 1, 2), lambda i, p, j: (i, p, 0, 0))),
        compiler_params=cparams12,
    )(ag, ax, coef, wpsi)

    # ---- tiny glue: psi BatchNorm affine -> 2 SMEM scalars -------------------
    ptot = jnp.sum(pstat, axis=(0, 1))                        # (1, 2)
    mean_p = ptot[0, 0] / cnt
    var_p = jnp.maximum(ptot[0, 1] / cnt - mean_p * mean_p, 0.0)
    s_p = params["gamma_p"].astype(jnp.float32)[0] * lax.rsqrt(var_p + _BN_EPS)
    o_p = params["beta_p"].astype(jnp.float32)[0] - mean_p * s_p
    psi_coef = jnp.stack([s_p, o_p]).astype(jnp.float32)      # (2,) -> SMEM

    # ---- pass 3: out = x * sigmoid(BN(psi_raw))  (x in its original dtype) ---
    approx = bool(jnp.dtype(compute_dtype) != jnp.dtype(jnp.float32))
    out = pl.pallas_call(
        functools.partial(_pass3_kernel, approx_recip=approx),
        out_shape=jax.ShapeDtypeStruct((n, f_l, hw), x_nchw.dtype),
        grid=(n, nt),
        in_specs=[pl.BlockSpec(memory_space=pltpu.MemorySpace.SMEM),
                  pl.BlockSpec((1, f_l, t), lambda i, j: (i, 0, j)),
                  pl.BlockSpec((1, 1, t), lambda i, j: (i, 0, j))],
        out_specs=pl.BlockSpec((1, f_l, t), lambda i, j: (i, 0, j)),
        compiler_params=pltpu.CompilerParams(
            dimension_semantics=("parallel", "parallel"),
            vmem_limit_bytes=vmem_limit),
    )(psi_coef, x3, psi_raw)

    return out.reshape(n, f_l, h, w)


def _reference_forward(g, x, params):
    """Pure-JAX reference (lax.conv) matching torch training-mode forward."""
    def conv1x1(inp, wgt, b):
        y = lax.conv_general_dilated(
            inp, wgt, window_strides=(1, 1), padding="VALID",
            dimension_numbers=("NCHW", "OIHW", "NCHW"))
        return y + b.reshape(1, -1, 1, 1)

    def bn(y, gamma, beta):
        m = jnp.mean(y, axis=(0, 2, 3), keepdims=True)
        v = jnp.mean((y - m) ** 2, axis=(0, 2, 3), keepdims=True)
        return ((y - m) * lax.rsqrt(v + _BN_EPS)) * gamma.reshape(1, -1, 1, 1) \
            + beta.reshape(1, -1, 1, 1)

    g1 = bn(conv1x1(g, params["wg"], params["bg"]),
            params["gamma_g"], params["beta_g"])
    x1 = bn(conv1x1(x, params["wx"], params["bx"]),
            params["gamma_x"], params["beta_x"])
    p = jax.nn.relu(g1 + x1)
    p = jax.nn.sigmoid(bn(conv1x1(p, params["wpsi"], params["bpsi"]),
                          params["gamma_p"], params["beta_p"]))
    return x * p


if __name__ == "__main__":
    # TODO(synk): BatchNorm running_mean/running_var buffer updates (training-
    # time side effects that do not change this forward's output) are not
    # modeled; conv biases are dropped only because training-mode BN cancels
    # them (re-apply them if this path is ever reused with running stats).
    key = jax.random.PRNGKey(0)
    n, f_g, f_l, hsz = 2, 16, 8, 16
    f_int = max(f_l // 2, 1)
    ks = jax.random.split(key, 16)

    g = jax.random.normal(ks[0], (n, f_g, hsz, hsz), jnp.float32)
    x = jax.random.normal(ks[1], (n, f_l, hsz, hsz), jnp.float32)
    params = {
        "wg": 0.2 * jax.random.normal(ks[2], (f_int, f_g, 1, 1), jnp.float32),
        "bg": 0.1 * jax.random.normal(ks[3], (f_int,), jnp.float32),
        "gamma_g": 1.0 + 0.1 * jax.random.normal(ks[4], (f_int,), jnp.float32),
        "beta_g": 0.1 * jax.random.normal(ks[5], (f_int,), jnp.float32),
        "wx": 0.2 * jax.random.normal(ks[6], (f_int, f_l, 1, 1), jnp.float32),
        "bx": 0.1 * jax.random.normal(ks[7], (f_int,), jnp.float32),
        "gamma_x": 1.0 + 0.1 * jax.random.normal(ks[8], (f_int,), jnp.float32),
        "beta_x": 0.1 * jax.random.normal(ks[9], (f_int,), jnp.float32),
        "wpsi": 0.2 * jax.random.normal(ks[10], (1, f_int, 1, 1), jnp.float32),
        "bpsi": 0.1 * jax.random.normal(ks[11], (1,), jnp.float32),
        "gamma_p": 1.0 + 0.1 * jax.random.normal(ks[12], (1,), jnp.float32),
        "beta_p": 0.1 * jax.random.normal(ks[13], (1,), jnp.float32),
    }

    ref = _reference_forward(g, x, params)

    # Production path: bf16 MXU operands.  Tolerance dominated by bf16 operand
    # rounding of the matmuls / stored ag-ax intermediates, not kernel math.
    fwd_bf16 = jax.jit(functools.partial(attention_block_forward,
                                         compute_dtype=jnp.bfloat16))
    out = jax.block_until_ready(fwd_bf16(g, x, params))
    assert out.shape == (n, f_l, hsz, hsz), out.shape
    err_bf16 = float(jnp.max(jnp.abs(out - ref)))
    assert err_bf16 < 1e-1, f"bf16 path mismatch, max abs err = {err_bf16}"

    # f32 operands: strict check that the kernel math matches the torch module.
    fwd_f32 = jax.jit(functools.partial(attention_block_forward,
                                        compute_dtype=jnp.float32))
    out32 = jax.block_until_ready(fwd_f32(g, x, params))
    err_f32 = float(jnp.max(jnp.abs(out32 - ref)))
    assert err_f32 < 2e-3, f"f32 path mismatch, max abs err = {err_f32}"

    # Batch-1 case exercises the 2-way HW split (dual-TensorCore path on v7x).
    g1 = jax.random.normal(ks[14], (1, f_g, hsz, hsz), jnp.float32)
    x1 = jax.random.normal(ks[15], (1, f_l, hsz, hsz), jnp.float32)
    ref1 = _reference_forward(g1, x1, params)
    out1 = jax.block_until_ready(fwd_f32(g1, x1, params))
    err_split = float(jnp.max(jnp.abs(out1 - ref1)))
    assert err_split < 2e-3, f"split path mismatch, max abs err = {err_split}"

    print("KERNEL_OK")
</pallas_src>

<mosaic_0001>
module attributes {stable_mosaic.version = 11 : i64} {
  func.func @_pass1_kernel(%arg0: i32, %arg1: i32, %arg2: i32, %arg3: memref<1x16x256xf32, #tpu.memory_space<vmem>>, %arg4: memref<1x8x256xf32, #tpu.memory_space<vmem>>, %arg5: memref<4x16xbf16, #tpu.memory_space<vmem>>, %arg6: memref<4x8xbf16, #tpu.memory_space<vmem>>, %arg7: memref<1x4x256xbf16, #tpu.memory_space<vmem>>, %arg8: memref<1x4x256xbf16, #tpu.memory_space<vmem>>, %arg9: memref<1x1x4x4xf32, #tpu.memory_space<vmem>>) attributes {dimension_semantics = [#tpu.dimension_semantics<parallel>, #tpu.dimension_semantics<parallel>, #tpu.dimension_semantics<arbitrary>], iteration_bounds = array<i64: 2, 1, 1>, scalar_prefetch = 0 : i64, scratch_operands = 0 : i64, tpu.core_type = #tpu.core_type<tc>, window_params = [{transform_indices = @transform_0, window_bounds = array<i64: 1, 16, 256>}, {transform_indices = @transform_1, window_bounds = array<i64: 1, 8, 256>}, {pipeline_mode = #tpu.pipeline_mode<synchronous>, transform_indices = @transform_2, window_bounds = array<i64: 4, 16>}, {pipeline_mode = #tpu.pipeline_mode<synchronous>, transform_indices = @transform_3, window_bounds = array<i64: 4, 8>}, {transform_indices = @transform_4, window_bounds = array<i64: 1, 4, 256>}, {transform_indices = @transform_5, window_bounds = array<i64: 1, 4, 256>}, {transform_indices = @transform_6, window_bounds = array<i64: 1, 1, 4, 4>}]} {
    %c0 = arith.constant 0 : index
    %c0_0 = arith.constant 0 : index
    %0 = vector.load %arg5[%c0, %c0_0] : memref<4x16xbf16, #tpu.memory_space<vmem>>, vector<4x16xbf16>
    %c0_1 = arith.constant 0 : index
    %c0_2 = arith.constant 0 : index
    %1 = vector.load %arg6[%c0_1, %c0_2] : memref<4x8xbf16, #tpu.memory_space<vmem>>, vector<4x8xbf16>
    %c0_3 = arith.constant 0 : index
    %c0_4 = arith.constant 0 : index
    %c0_5 = arith.constant 0 : index
    %2 = vector.load %arg3[%c0_3, %c0_4, %c0_5] : memref<1x16x256xf32, #tpu.memory_space<vmem>>, vector<1x16x256xf32>
    %3 = vector.shape_cast %2 : vector<1x16x256xf32> to vector<16x256xf32>
    %4 = arith.truncf %3 : vector<16x256xf32> to vector<16x256xbf16>
    %cst = arith.constant dense<0.000000e+00> : vector<4x256xf32>
    %5 = tpu.matmul %0, %4, %cst {dimension_numbers = #tpu.dot_dimension_numbers<[1], [0], [0], [1], [0, 0, 1, 1], [], []>} : vector<4x16xbf16>, vector<16x256xbf16>, vector<4x256xf32> -> vector<4x256xf32>
    %c0_6 = arith.constant 0 : index
    %c0_7 = arith.constant 0 : index
    %c0_8 = arith.constant 0 : index
    %6 = vector.load %arg4[%c0_6, %c0_7, %c0_8] : memref<1x8x256xf32, #tpu.memory_space<vmem>>, vector<1x8x256xf32>
    %7 = vector.shape_cast %6 : vector<1x8x256xf32> to vector<8x256xf32>
    %8 = arith.truncf %7 : vector<8x256xf32> to vector<8x256xbf16>
    %cst_9 = arith.constant dense<0.000000e+00> : vector<4x256xf32>
    %9 = tpu.matmul %1, %8, %cst_9 {dimension_numbers = #tpu.dot_dimension_numbers<[1], [0], [0], [1], [0, 0, 1, 1], [], []>} : vector<4x8xbf16>, vector<8x256xbf16>, vector<4x256xf32> -> vector<4x256xf32>
    %10 = vector.shape_cast %5 : vector<4x256xf32> to vector<1x4x256xf32>
    %11 = arith.truncf %10 : vector<1x4x256xf32> to vector<1x4x256xbf16>
    %c0_10 = arith.constant 0 : index
    %c0_11 = arith.constant 0 : index
    %c0_12 = arith.constant 0 : index
    %12 = vector.load %arg7[%c0_10, %c0_11, %c0_12] : memref<1x4x256xbf16, #tpu.memory_space<vmem>>, vector<1x4x256xbf16>
    tpu.vector_store %arg7[%c0_10, %c0_11, %c0_12], %11 {strides = array<i32>} : memref<1x4x256xbf16, #tpu.memory_space<vmem>>, vector<1x4x256xbf16>,
    %13 = vector.shape_cast %9 : vector<4x256xf32> to vector<1x4x256xf32>
    %14 = arith.truncf %13 : vector<1x4x256xf32> to vector<1x4x256xbf16>
    %c0_13 = arith.constant 0 : index
    %c0_14 = arith.constant 0 : index
    %c0_15 = arith.constant 0 : index
    %15 = vector.load %arg8[%c0_13, %c0_14, %c0_15] : memref<1x4x256xbf16, #tpu.memory_space<vmem>>, vector<1x4x256xbf16>
    tpu.vector_store %arg8[%c0_13, %c0_14, %c0_15], %14 {strides = array<i32>} : memref<1x4x256xbf16, #tpu.memory_space<vmem>>, vector<1x4x256xbf16>,
    %cst_16 = arith.constant dense<0.000000e+00> : vector<4xf32>
    %16 = vector.multi_reduction <add>, %5, %cst_16 [1] : vector<4x256xf32> to vector<4xf32>
    %17 = vector.shape_cast %16 : vector<4xf32> to vector<4x1xf32>
    %18 = arith.mulf %5, %5 : vector<4x256xf32>
    %cst_17 = arith.constant dense<0.000000e+00> : vector<4xf32>
    %19 = vector.multi_reduction <add>, %18, %cst_17 [1] : vector<4x256xf32> to vector<4xf32>
    %20 = vector.shape_cast %19 : vector<4xf32> to vector<4x1xf32>
    %cst_18 = arith.constant dense<0.000000e+00> : vector<4xf32>
    %21 = vector.multi_reduction <add>, %9, %cst_18 [1] : vector<4x256xf32> to vector<4xf32>
    %22 = vector.shape_cast %21 : vector<4xf32> to vector<4x1xf32>
    %23 = arith.mulf %9, %9 : vector<4x256xf32>
    %cst_19 = arith.constant dense<0.000000e+00> : vector<4xf32>
    %24 = vector.multi_reduction <add>, %23, %cst_19 [1] : vector<4x256xf32> to vector<4xf32>
    %25 = vector.shape_cast %24 : vector<4xf32> to vector<4x1xf32>
    %26 = tpu.concatenate %17, %20, %22, %25 in 1 : vector<4x1xf32>, vector<4x1xf32>, vector<4x1xf32>, vector<4x1xf32> -> vector<4x4xf32>
    %c0_i32 = arith.constant 0 : i32
    %27 = arith.cmpi eq, %arg2, %c0_i32 : i32
    %28 = arith.extui %27 : i1 to i32
    %c0_i32_20 = arith.constant 0 : i32
    %29 = arith.cmpi ne, %28, %c0_i32_20 : i32
    scf.if %29 {
      %cst_29 = arith.constant 0.000000e+00 : f32
      %34 = vector.broadcast %cst_29 : f32 to vector<1x1x4x4xf32>
      %c0_30 = arith.constant 0 : index
      %c0_31 = arith.constant 0 : index
      %c0_32 = arith.constant 0 : index
      %c0_33 = arith.constant 0 : index
      %35 = vector.load %arg9[%c0_30, %c0_31, %c0_32, %c0_33] : memref<1x1x4x4xf32, #tpu.memory_space<vmem>>, vector<1x1x4x4xf32>
      tpu.vector_store %arg9[%c0_30, %c0_31, %c0_32, %c0_33], %34 {strides = array<i32>} : memref<1x1x4x4xf32, #tpu.memory_space<vmem>>, vector<1x1x4x4xf32>,
    } else {
    }
    %c0_21 = arith.constant 0 : index
    %c0_22 = arith.constant 0 : index
    %c0_23 = arith.constant 0 : index
    %c0_24 = arith.constant 0 : index
    %30 = vector.load %arg9[%c0_21, %c0_22, %c0_23, %c0_24] : memref<1x1x4x4xf32, #tpu.memory_space<vmem>>, vector<1x1x4x4xf32>
    %31 = vector.shape_cast %26 : vector<4x4xf32> to vector<1x1x4x4xf32>
    %32 = arith.addf %30, %31 : vector<1x1x4x4xf32>
    %c0_25 = arith.constant 0 : index
    %c0_26 = arith.constant 0 : index
    %c0_27 = arith.constant 0 : index
    %c0_28 = arith.constant 0 : index
    %33 = vector.load %arg9[%c0_25, %c0_26, %c0_27, %c0_28] : memref<1x1x4x4xf32, #tpu.memory_space<vmem>>, vector<1x1x4x4xf32>
    tpu.vector_store %arg9[%c0_25, %c0_26, %c0_27, %c0_28], %32 {strides = array<i32>} : memref<1x1x4x4xf32, #tpu.memory_space<vmem>>, vector<1x1x4x4xf32>,
    return
  }
  func.func @transform_0(%arg0: i32, %arg1: i32, %arg2: i32) -> (i32, i32, i32) {
    %c1_i32 = arith.constant 1 : i32
    %0 = arith.muli %arg1, %c1_i32 : i32
    %1 = arith.addi %0, %arg2 : i32
    %c0_i32 = arith.constant 0 : i32
    %c0_i32_0 = arith.constant 0 : i32
    return %arg0, %c0_i32, %1 : i32, i32, i32
  }
  func.func @transform_1(%arg0: i32, %arg1: i32, %arg2: i32) -> (i32, i32, i32) {
    %c1_i32 = arith.constant 1 : i32
    %0 = arith.muli %arg1, %c1_i32 : i32
    %1 = arith.addi %0, %arg2 : i32
    %c0_i32 = arith.constant 0 : i32
    %c0_i32_0 = arith.constant 0 : i32
    return %arg0, %c0_i32, %1 : i32, i32, i32
  }
  func.func @transform_2(%arg0: i32, %arg1: i32, %arg2: i32) -> (i32, i32) {
    %c0_i32 = arith.constant 0 : i32
    %c0_i32_0 = arith.constant 0 : i32
    %c0_i32_1 = arith.constant 0 : i32
    return %c0_i32, %c0_i32_0 : i32, i32
  }
  func.func @transform_3(%arg0: i32, %arg1: i32, %arg2: i32) -> (i32, i32) {
    %c0_i32 = arith.constant 0 : i32
    %c0_i32_0 = arith.constant 0 : i32
    %c0_i32_1 = arith.constant 0 : i32
    return %c0_i32, %c0_i32_0 : i32, i32
  }
  func.func @transform_4(%arg0: i32, %arg1: i32, %arg2: i32) -> (i32, i32, i32) {
    %c1_i32 = arith.constant 1 : i32
    %0 = arith.muli %arg1, %c1_i32 : i32
    %1 = arith.addi %0, %arg2 : i32
    %c0_i32 = arith.constant 0 : i32
    %c0_i32_0 = arith.constant 0 : i32
    return %arg0, %c0_i32, %1 : i32, i32, i32
  }
  func.func @transform_5(%arg0: i32, %arg1: i32, %arg2: i32) -> (i32, i32, i32) {
    %c1_i32 = arith.constant 1 : i32
    %0 = arith.muli %arg1, %c1_i32 : i32
    %1 = arith.addi %0, %arg2 : i32
    %c0_i32 = arith.constant 0 : i32
    %c0_i32_0 = arith.constant 0 : i32
    return %arg0, %c0_i32, %1 : i32, i32, i32
  }
  func.func @transform_6(%arg0: i32, %arg1: i32, %arg2: i32) -> (i32, i32, i32, i32) {
    %c0_i32 = arith.constant 0 : i32
    %c0_i32_0 = arith.constant 0 : i32
    %c0_i32_1 = arith.constant 0 : i32
    return %arg0, %arg1, %c0_i32, %c0_i32_0 : i32, i32, i32, i32
  }
}

module attributes {stable_mosaic.version = 11 : i64} {
  func.func @_pass2_kernel(%arg0: i32, %arg1: i32, %arg2: i32, %arg3: memref<1x4x256xbf16, #tpu.memory_space<vmem>>, %arg4: memref<1x4x256xbf16, #tpu.memory_space<vmem>>, %arg5: memref<4x4xf32, #tpu.memory_space<vmem>>, %arg6: memref<1x4xbf16, #tpu.memory_space<vmem>>, %arg7: memref<1x1x256xf32, #tpu.memory_space<vmem>>, %arg8: memref<1x1x1x2xf32, #tpu.memory_space<vmem>>) attributes {dimension_semantics = [#tpu.dimension_semantics<parallel>, #tpu.dimension_semantics<parallel>, #tpu.dimension_semantics<arbitrary>], iteration_bounds = array<i64: 2, 1, 1>, scalar_prefetch = 0 : i64, scratch_operands = 0 : i64, tpu.core_type = #tpu.core_type<tc>, window_params = [{transform_indices = @transform_0, window_bounds = array<i64: 1, 4, 256>}, {transform_indices = @transform_1, window_bounds = array<i64: 1, 4, 256>}, {pipeline_mode = #tpu.pipeline_mode<synchronous>, transform_indices = @transform_2, window_bounds = array<i64: 4, 4>}, {pipeline_mode = #tpu.pipeline_mode<synchronous>, transform_indices = @transform_3, window_bounds = array<i64: 1, 4>}, {transform_indices = @transform_4, window_bounds = array<i64: 1, 1, 256>}, {transform_indices = @transform_5, window_bounds = array<i64: 1, 1, 1, 2>}]} {
    %c0 = arith.constant 0 : index
    %c0_0 = arith.constant 0 : index
    %0 = vector.load %arg5[%c0, %c0_0] : memref<4x4xf32, #tpu.memory_space<vmem>>, vector<4x4xf32>
    %c0_1 = arith.constant 0 : index
    %c0_2 = arith.constant 0 : index
    %c0_3 = arith.constant 0 : index
    %1 = vector.load %arg3[%c0_1, %c0_2, %c0_3] : memref<1x4x256xbf16, #tpu.memory_space<vmem>>, vector<1x4x256xbf16>
    %2 = vector.shape_cast %1 : vector<1x4x256xbf16> to vector<4x256xbf16>
    %3 = arith.extf %2 : vector<4x256xbf16> to vector<4x256xf32>
    %c0_4 = arith.constant 0 : index
    %c0_5 = arith.constant 0 : index
    %c0_6 = arith.constant 0 : index
    %4 = vector.load %arg4[%c0_4, %c0_5, %c0_6] : memref<1x4x256xbf16, #tpu.memory_space<vmem>>, vector<1x4x256xbf16>
    %5 = vector.shape_cast %4 : vector<1x4x256xbf16> to vector<4x256xbf16>
    %6 = arith.extf %5 : vector<4x256xbf16> to vector<4x256xf32>
    %7 = vector.extract_strided_slice %0 {offsets = [0, 0], sizes = [4, 1], strides = [1, 1]} : vector<4x4xf32> to vector<4x1xf32>
    %8 = vector.broadcast %7 : vector<4x1xf32> to vector<4x256xf32>
    %9 = arith.mulf %3, %8 : vector<4x256xf32>
    %10 = vector.extract_strided_slice %0 {offsets = [0, 1], sizes = [4, 1], strides = [1, 1]} : vector<4x4xf32> to vector<4x1xf32>
    %11 = vector.broadcast %10 : vector<4x1xf32> to vector<4x256xf32>
    %12 = arith.mulf %6, %11 : vector<4x256xf32>
    %13 = arith.addf %9, %12 : vector<4x256xf32>
    %14 = vector.extract_strided_slice %0 {offsets = [0, 2], sizes = [4, 1], strides = [1, 1]} : vector<4x4xf32> to vector<4x1xf32>
    %15 = vector.broadcast %14 : vector<4x1xf32> to vector<4x256xf32>
    %16 = arith.addf %13, %15 : vector<4x256xf32>
    %cst = arith.constant 0.000000e+00 : f32
    %17 = vector.broadcast %cst : f32 to vector<4x256xf32>
    %18 = arith.maximumf %16, %17 : vector<4x256xf32>
    %c0_7 = arith.constant 0 : index
    %c0_8 = arith.constant 0 : index
    %19 = vector.load %arg6[%c0_7, %c0_8] : memref<1x4xbf16, #tpu.memory_space<vmem>>, vector<1x4xbf16>
    %20 = arith.truncf %18 : vector<4x256xf32> to vector<4x256xbf16>
    %cst_9 = arith.constant dense<0.000000e+00> : vector<1x256xf32>
    %21 = tpu.matmul %19, %20, %cst_9 {dimension_numbers = #tpu.dot_dimension_numbers<[1], [0], [0], [1], [0, 0, 1, 1], [], []>} : vector<1x4xbf16>, vector<4x256xbf16>, vector<1x256xf32> -> vector<1x256xf32>
    %22 = vector.shape_cast %21 : vector<1x256xf32> to vector<1x1x256xf32>
    %c0_10 = arith.constant 0 : index
    %c0_11 = arith.constant 0 : index
    %c0_12 = arith.constant 0 : index
    %23 = vector.load %arg7[%c0_10, %c0_11, %c0_12] : memref<1x1x256xf32, #tpu.memory_space<vmem>>, vector<1x1x256xf32>
    tpu.vector_store %arg7[%c0_10, %c0_11, %c0_12], %22 {strides = array<i32>} : memref<1x1x256xf32, #tpu.memory_space<vmem>>, vector<1x1x256xf32>,
    %cst_13 = arith.constant dense<0.000000e+00> : vector<1xf32>
    %24 = vector.multi_reduction <add>, %21, %cst_13 [1] : vector<1x256xf32> to vector<1xf32>
    %25 = vector.shape_cast %24 : vector<1xf32> to vector<1x1xf32>
    %26 = arith.mulf %21, %21 : vector<1x256xf32>
    %cst_14 = arith.constant dense<0.000000e+00> : vector<1xf32>
    %27 = vector.multi_reduction <add>, %26, %cst_14 [1] : vector<1x256xf32> to vector<1xf32>
    %28 = vector.shape_cast %27 : vector<1xf32> to vector<1x1xf32>
    %29 = tpu.concatenate %25, %28 in 1 : vector<1x1xf32>, vector<1x1xf32> -> vector<1x2xf32>
    %c0_i32 = arith.constant 0 : i32
    %30 = arith.cmpi eq, %arg2, %c0_i32 : i32
    %31 = arith.extui %30 : i1 to i32
    %c0_i32_15 = arith.constant 0 : i32
    %32 = arith.cmpi ne, %31, %c0_i32_15 : i32
    scf.if %32 {
      %cst_24 = arith.constant 0.000000e+00 : f32
      %37 = vector.broadcast %cst_24 : f32 to vector<1x1x1x2xf32>
      %c0_25 = arith.constant 0 : index
      %c0_26 = arith.constant 0 : index
      %c0_27 = arith.constant 0 : index
      %c0_28 = arith.constant 0 : index
      %38 = vector.load %arg8[%c0_25, %c0_26, %c0_27, %c0_28] : memref<1x1x1x2xf32, #tpu.memory_space<vmem>>, vector<1x1x1x2xf32>
      tpu.vector_store %arg8[%c0_25, %c0_26, %c0_27, %c0_28], %37 {strides = array<i32>} : memref<1x1x1x2xf32, #tpu.memory_space<vmem>>, vector<1x1x1x2xf32>,
    } else {
    }
    %c0_16 = arith.constant 0 : index
    %c0_17 = arith.constant 0 : index
    %c0_18 = arith.constant 0 : index
    %c0_19 = arith.constant 0 : index
    %33 = vector.load %arg8[%c0_16, %c0_17, %c0_18, %c0_19] : memref<1x1x1x2xf32, #tpu.memory_space<vmem>>, vector<1x1x1x2xf32>
    %34 = vector.shape_cast %29 : vector<1x2xf32> to vector<1x1x1x2xf32>
    %35 = arith.addf %33, %34 : vector<1x1x1x2xf32>
    %c0_20 = arith.constant 0 : index
    %c0_21 = arith.constant 0 : index
    %c0_22 = arith.constant 0 : index
    %c0_23 = arith.constant 0 : index
    %36 = vector.load %arg8[%c0_20, %c0_21, %c0_22, %c0_23] : memref<1x1x1x2xf32, #tpu.memory_space<vmem>>, vector<1x1x1x2xf32>
    tpu.vector_store %arg8[%c0_20, %c0_21, %c0_22, %c0_23], %35 {strides = array<i32>} : memref<1x1x1x2xf32, #tpu.memory_space<vmem>>, vector<1x1x1x2xf32>,
    return
  }
  func.func @transform_0(%arg0: i32, %arg1: i32, %arg2: i32) -> (i32, i32, i32) {
    %c1_i32 = arith.constant 1 : i32
    %0 = arith.muli %arg1, %c1_i32 : i32
    %1 = arith.addi %0, %arg2 : i32
    %c0_i32 = arith.constant 0 : i32
    %c0_i32_0 = arith.constant 0 : i32
    return %arg0, %c0_i32, %1 : i32, i32, i32
  }
  func.func @transform_1(%arg0: i32, %arg1: i32, %arg2: i32) -> (i32, i32, i32) {
    %c1_i32 = arith.constant 1 : i32
    %0 = arith.muli %arg1, %c1_i32 : i32
    %1 = arith.addi %0, %arg2 : i32
    %c0_i32 = arith.constant 0 : i32
    %c0_i32_0 = arith.constant 0 : i32
    return %arg0, %c0_i32, %1 : i32, i32, i32
  }
  func.func @transform_2(%arg0: i32, %arg1: i32, %arg2: i32) -> (i32, i32) {
    %c0_i32 = arith.constant 0 : i32
    %c0_i32_0 = arith.constant 0 : i32
    %c0_i32_1 = arith.constant 0 : i32
    return %c0_i32, %c0_i32_0 : i32, i32
  }
  func.func @transform_3(%arg0: i32, %arg1: i32, %arg2: i32) -> (i32, i32) {
    %c0_i32 = arith.constant 0 : i32
    %c0_i32_0 = arith.constant 0 : i32
    %c0_i32_1 = arith.constant 0 : i32
    return %c0_i32, %c0_i32_0 : i32, i32
  }
  func.func @transform_4(%arg0: i32, %arg1: i32, %arg2: i32) -> (i32, i32, i32) {
    %c1_i32 = arith.constant 1 : i32
    %0 = arith.muli %arg1, %c1_i32 : i32
    %1 = arith.addi %0, %arg2 : i32
    %c0_i32 = arith.constant 0 : i32
    %c0_i32_0 = arith.constant 0 : i32
    return %arg0, %c0_i32, %1 : i32, i32, i32
  }
  func.func @transform_5(%arg0: i32, %arg1: i32, %arg2: i32) -> (i32, i32, i32, i32) {
    %c0_i32 = arith.constant 0 : i32
    %c0_i32_0 = arith.constant 0 : i32
    %c0_i32_1 = arith.constant 0 : i32
    return %arg0, %arg1, %c0_i32, %c0_i32_0 : i32, i32, i32, i32
  }
}

module attributes {stable_mosaic.version = 11 : i64} {
  func.func @_pass3_kernel(%arg0: i32, %arg1: i32, %arg2: memref<2xf32, #tpu.memory_space<smem>>, %arg3: memref<1x8x256xf32, #tpu.memory_space<vmem>>, %arg4: memref<1x1x256xf32, #tpu.memory_space<vmem>>, %arg5: memref<1x8x256xf32, #tpu.memory_space<vmem>>) attributes {dimension_semantics = [#tpu.dimension_semantics<parallel>, #tpu.dimension_semantics<parallel>], iteration_bounds = array<i64: 2, 1>, scalar_prefetch = 0 : i64, scratch_operands = 0 : i64, tpu.core_type = #tpu.core_type<tc>, window_params = [{transform_indices = @transform_0, window_bounds = array<i64: 2>}, {transform_indices = @transform_1, window_bounds = array<i64: 1, 8, 256>}, {transform_indices = @transform_2, window_bounds = array<i64: 1, 1, 256>}, {transform_indices = @transform_3, window_bounds = array<i64: 1, 8, 256>}]} {
    %c0 = arith.constant 0 : index
    %0 = memref.load %arg2[%c0] : memref<2xf32, #tpu.memory_space<smem>>
    %c1 = arith.constant 1 : index
    %1 = memref.load %arg2[%c1] : memref<2xf32, #tpu.memory_space<smem>>
    %c0_0 = arith.constant 0 : index
    %c0_1 = arith.constant 0 : index
    %c0_2 = arith.constant 0 : index
    %2 = vector.load %arg4[%c0_0, %c0_1, %c0_2] : memref<1x1x256xf32, #tpu.memory_space<vmem>>, vector<1x1x256xf32>
    %3 = vector.shape_cast %2 : vector<1x1x256xf32> to vector<1x256xf32>
    %4 = vector.broadcast %0 : f32 to vector<1x256xf32>
    %5 = arith.mulf %3, %4 : vector<1x256xf32>
    %6 = vector.broadcast %1 : f32 to vector<1x256xf32>
    %7 = arith.addf %5, %6 : vector<1x256xf32>
    %cst = arith.constant 0.000000e+00 : f32
    %8 = vector.broadcast %cst : f32 to vector<1x256xf32>
    %9 = arith.subf %8, %7 : vector<1x256xf32>
    %10 = math.exp %9 : vector<1x256xf32>
    %cst_3 = arith.constant 1.000000e+00 : f32
    %11 = vector.broadcast %cst_3 : f32 to vector<1x256xf32>
    %12 = arith.addf %11, %10 : vector<1x256xf32>
    %13 = tpu.reciprocal %12 {approx = true} : vector<1x256xf32> -> vector<1x256xf32>
    %c0_4 = arith.constant 0 : index
    %c0_5 = arith.constant 0 : index
    %c0_6 = arith.constant 0 : index
    %14 = vector.load %arg3[%c0_4, %c0_5, %c0_6] : memref<1x8x256xf32, #tpu.memory_space<vmem>>, vector<1x8x256xf32>
    %15 = vector.shape_cast %14 : vector<1x8x256xf32> to vector<8x256xf32>
    %16 = vector.broadcast %13 : vector<1x256xf32> to vector<8x256xf32>
    %17 = arith.mulf %15, %16 : vector<8x256xf32>
    %18 = vector.shape_cast %17 : vector<8x256xf32> to vector<1x8x256xf32>
    %c0_7 = arith.constant 0 : index
    %c0_8 = arith.constant 0 : index
    %c0_9 = arith.constant 0 : index
    %19 = vector.load %arg5[%c0_7, %c0_8, %c0_9] : memref<1x8x256xf32, #tpu.memory_space<vmem>>, vector<1x8x256xf32>
    tpu.vector_store %arg5[%c0_7, %c0_8, %c0_9], %18 {strides = array<i32>} : memref<1x8x256xf32, #tpu.memory_space<vmem>>, vector<1x8x256xf32>,
    return
  }
  func.func @transform_0(%arg0: i32, %arg1: i32) -> i32 {
    %c0_i32 = arith.constant 0 : i32
    %c0_i32_0 = arith.constant 0 : i32
    return %c0_i32 : i32
  }
  func.func @transform_1(%arg0: i32, %arg1: i32) -> (i32, i32, i32) {
    %c0_i32 = arith.constant 0 : i32
    %c0_i32_0 = arith.constant 0 : i32
    return %arg0, %c0_i32, %arg1 : i32, i32, i32
  }
  func.func @transform_2(%arg0: i32, %arg1: i32) -> (i32, i32, i32) {
    %c0_i32 = arith.constant 0 : i32
    %c0_i32_0 = arith.constant 0 : i32
    return %arg0, %c0_i32, %arg1 : i32, i32, i32
  }
  func.func @transform_3(%arg0: i32, %arg1: i32) -> (i32, i32, i32) {
    %c0_i32 = arith.constant 0 : i32
    %c0_i32_0 = arith.constant 0 : i32
    return %arg0, %c0_i32, %arg1 : i32, i32, i32
  }
}

</mosaic_0001>

<llo_original>
// kernel: attention_block_forward.4
$region0: #{attention_block_forward.4}
  #allocation0 [shape = 'u32[]', space=smem, size = 0x4, offset = 0x4, fixed_abs, tag = 'smem constant byte address 0x4 - core index']
  #allocation1 [shape = 'u32[144,128]{1,0:T(1,128)}', space=vmem, size = 0x12000, scoped, tag = 'internal scratch']
  %s0 = inlined_call_operand.vmem [shape: bf16[2,4,256], index: 0, kind: input, shape index: {}]
  %s1 = inlined_call_operand.vmem [shape: bf16[2,4,256], index: 1, kind: input, shape index: {}]
  %s2 = inlined_call_operand.vmem [shape: f32[4,4], index: 2, kind: input, shape index: {}]
  %s3 = inlined_call_operand.vmem [shape: bf16[1,4], index: 3, kind: input, shape index: {}]
  %s4 = inlined_call_operand.vmem [shape: f32[2,1,256], index: 4, kind: output, shape index: {0}]
  %s5 = inlined_call_operand.vmem [shape: f32[2,1,1,2], index: 5, kind: output, shape index: {1}]
  %6 = xla_tuple %s4, %s5
  %s7 = sld [smem:[#allocation0]]
  $region61: #{attention_block_forward.4} parent=0
    _
  %s9 = ssub.s32 1, %s7
  %s10 = scalar_select 0, %s9, %s7
  loop: start=0, step=1, limit=4
  $region2: #{attention_block_forward.4} parent=0 // loop_pre_header
    _
  $region3: #{attention_block_forward.4} parent=0 // loop_header
    %s12 = sphi 0, %s16
    %p13 = scmp.ge.s32.totalorder %s12, 4
    %s19 = sphi 0, %s38
    %s20 = sphi 0, %s34
    %s21 = sphi 0, %s30
    %s22 = sphi 0, %s19
    %s23 = sphi 0, %s20
    %s24 = sphi 0, %s21
    %s25 = sphi 0, %s22
    %s26 = sphi 0, %s23
    %s27 = sphi 0, %s24
    %s45 = sphi 0, %s47
    %s48 = sphi 0, %s45
    %s49 = sphi 0, %s48
    %s65 = sphi 0, %s49
    %s75 = sphi 0, %s77
    %s78 = sphi 0, %s75
    %s79 = sphi 0, %s78
    %s95 = sphi 0, %s79
    %s99 = sphi 0, %s99
    %s101 = sphi 0, %s99
    %s102 = sphi 0, %s101
    %s116 = sphi 0, %s102
    %s120 = sphi 0, %s120
    %s122 = sphi 0, %s120
    %s123 = sphi 0, %s122
    %s137 = sphi 0, %s123
    %s147 = sphi 0, %s149
    %s150 = sphi 0, %s147
    %s151 = sphi 0, %s150
    %s167 = sphi 0, %s151
    %s175 = sphi 0, %s177
    %s178 = sphi 0, %s175
    %s179 = sphi 0, %s178
    %s195 = sphi 0, %s179
  $region4: #{attention_block_forward.4} parent=0 // loop_header_branch
    %15 = sbr.rel (%p13) target = $region8
  $region5: #{attention_block_forward.4} parent=0 // loop_body
    %s17 = ssub.s32 %s12, 1
    %s18 = ssub.s32 %s12, 2
    %s28 = sadd.s32 1, %s21
    %p29 = scmp.ge.s32.totalorder %s28, 1
    %s30 = scalar_select %p29, 0, %s28
    %s31 = sadd.s32 1, %s20
    %s32 = scalar_select %p29, %s31, %s20
    %p33 = scmp.ge.s32.totalorder %s32, 1
    %s34 = scalar_select %p33, 0, %s32
    %s35 = sadd.s32 1, %s19
    %s36 = scalar_select %p33, %s35, %s19
    %p37 = scmp.ge.s32.totalorder %s36, 2
    %s38 = scalar_select %p37, 0, %s36
    %s39 = sadd.s32 %s20, %s21
    %s40 = sadd.s32 %s34, %s30
    %s41 = ssub.s32 %s19, %s38
    %s42 = ssub.s32 %s39, %s40
    %s43 = sor.u32 %s41, %s42
    %p44 = scmp.eq.s32.totalorder %s43, 0
    %s46 = sadd.s32 %s45, 1
    %s47 = scalar_select %p44, %s45, %s46
    %p50 = pneg %p44
    %p51 = scmp.eq.s32.totalorder %s12, 1
    %p52 = por %p50, %p51
    %p53 = scmp.ne.s32.totalorder %s45, %s48
    %p54 = scmp.eq.s32.totalorder %s12, 0
    %p55 = por %p53, %p54
    %p56 = scmp.ne.s32.totalorder %s45, %s48
    %p57 = scmp.eq.s32.totalorder %s17, 1
    %p58 = por %p56, %p57
    %p59 = scmp.ne.s32.totalorder %s48, %s49
    %p60 = scmp.eq.s32.totalorder %s17, 0
    %p61 = por %p59, %p60
    %p62 = scmp.ne.s32.totalorder %s48, %s49
    %p63 = scmp.eq.s32.totalorder %s18, 1
    %p64 = por %p62, %p63
    %p66 = scmp.ne.s32.totalorder %s49, %s65
    %p67 = scmp.eq.s32.totalorder %s18, 0
    %p68 = por %p66, %p67
    %s69 = sadd.s32 %s20, %s21
    %s70 = sadd.s32 %s34, %s30
    %s71 = ssub.s32 %s19, %s38
    %s72 = ssub.s32 %s69, %s70
    %s73 = sor.u32 %s71, %s72
    %p74 = scmp.eq.s32.totalorder %s73, 0
    %s76 = sadd.s32 %s75, 1
    %s77 = scalar_select %p74, %s75, %s76
    %p80 = pneg %p74
    %p81 = scmp.eq.s32.totalorder %s12, 1
    %p82 = por %p80, %p81
    %p83 = scmp.ne.s32.totalorder %s75, %s78
    %p84 = scmp.eq.s32.totalorder %s12, 0
    %p85 = por %p83, %p84
    %p86 = scmp.ne.s32.totalorder %s75, %s78
    %p87 = scmp.eq.s32.totalorder %s17, 1
    %p88 = por %p86, %p87
    %p89 = scmp.ne.s32.totalorder %s78, %s79
    %p90 = scmp.eq.s32.totalorder %s17, 0
    %p91 = por %p89, %p90
    %p92 = scmp.ne.s32.totalorder %s78, %s79
    %p93 = scmp.eq.s32.totalorder %s18, 1
    %p94 = por %p92, %p93
    %p96 = scmp.ne.s32.totalorder %s79, %s95
    %p97 = scmp.eq.s32.totalorder %s18, 0
    %p98 = por %p96, %p97
    %s100 = sadd.s32 %s99, 1
    %p103 = scmp.eq.s32.totalorder %s12, 1
    %p104 = scmp.ne.s32.totalorder %s99, %s101
    %p105 = scmp.eq.s32.totalorder %s12, 0
    %p106 = por %p104, %p105
    %p107 = scmp.ne.s32.totalorder %s99, %s101
    %p108 = scmp.eq.s32.totalorder %s17, 1
    %p109 = por %p107, %p108
    %p110 = scmp.ne.s32.totalorder %s101, %s102
    %p111 = scmp.eq.s32.totalorder %s17, 0
    %p112 = por %p110, %p111
    %p113 = scmp.ne.s32.totalorder %s101, %s102
    %p114 = scmp.eq.s32.totalorder %s18, 1
    %p115 = por %p113, %p114
    %p117 = scmp.ne.s32.totalorder %s102, %s116
    %p118 = scmp.eq.s32.totalorder %s18, 0
    %p119 = por %p117, %p118
    %s121 = sadd.s32 %s120, 1
    %p124 = scmp.eq.s32.totalorder %s12, 1
    %p125 = scmp.ne.s32.totalorder %s120, %s122
    %p126 = scmp.eq.s32.totalorder %s12, 0
    %p127 = por %p125, %p126
    %p128 = scmp.ne.s32.totalorder %s120, %s122
    %p129 = scmp.eq.s32.totalorder %s17, 1
    %p130 = por %p128, %p129
    %p131 = scmp.ne.s32.totalorder %s122, %s123
    %p132 = scmp.eq.s32.totalorder %s17, 0
    %p133 = por %p131, %p132
    %p134 = scmp.ne.s32.totalorder %s122, %s123
    %p135 = scmp.eq.s32.totalorder %s18, 1
    %p136 = por %p134, %p135
    %p138 = scmp.ne.s32.totalorder %s123, %s137
    %p139 = scmp.eq.s32.totalorder %s18, 0
    %p140 = por %p138, %p139
    %s141 = sadd.s32 %s20, %s21
    %s142 = sadd.s32 %s34, %s30
    %s143 = ssub.s32 %s19, %s38
    %s144 = ssub.s32 %s141, %s142
    %s145 = sor.u32 %s143, %s144
    %p146 = scmp.eq.s32.totalorder %s145, 0
    %s148 = sadd.s32 %s147, 1
    %s149 = scalar_select %p146, %s147, %s148
    %p152 = pneg %p146
    %p153 = scmp.eq.s32.totalorder %s12, 1
    %p154 = por %p152, %p153
    %p155 = scmp.ne.s32.totalorder %s147, %s150
    %p156 = scmp.eq.s32.totalorder %s12, 0
    %p157 = por %p155, %p156
    %p158 = scmp.ne.s32.totalorder %s147, %s150
    %p159 = scmp.eq.s32.totalorder %s17, 1
    %p160 = por %p158, %p159
    %p161 = scmp.ne.s32.totalorder %s150, %s151
    %p162 = scmp.eq.s32.totalorder %s17, 0
    %p163 = por %p161, %p162
    %p164 = scmp.ne.s32.totalorder %s150, %s151
    %p165 = scmp.eq.s32.totalorder %s18, 1
    %p166 = por %p164, %p165
    %p168 = scmp.ne.s32.totalorder %s151, %s167
    %p169 = scmp.eq.s32.totalorder %s18, 0
    %p170 = por %p168, %p169
    %s171 = ssub.s32 %s19, %s38
    %s172 = ssub.s32 %s20, %s34
    %s173 = sor.u32 %s171, %s172
    %p174 = scmp.eq.s32.totalorder %s173, 0
    %s176 = sadd.s32 %s175, 1
    %s177 = scalar_select %p174, %s175, %s176
    %p180 = pneg %p174
    %p181 = scmp.eq.s32.totalorder %s12, 1
    %p182 = por %p180, %p181
    %p183 = scmp.ne.s32.totalorder %s175, %s178
    %p184 = scmp.eq.s32.totalorder %s12, 0
    %p185 = por %p183, %p184
    %p186 = scmp.ne.s32.totalorder %s175, %s178
    %p187 = scmp.eq.s32.totalorder %s17, 1
    %p188 = por %p186, %p187
    %p189 = scmp.ne.s32.totalorder %s178, %s179
    %p190 = scmp.eq.s32.totalorder %s17, 0
    %p191 = por %p189, %p190
    %p192 = scmp.ne.s32.totalorder %s178, %s179
    %p193 = scmp.eq.s32.totalorder %s18, 1
    %p194 = por %p192, %p193
    %p196 = scmp.ne.s32.totalorder %s179, %s195
    %p197 = scmp.eq.s32.totalorder %s18, 0
    %p198 = por %p196, %p197
    %p199 = scmp.le.s32.totalorder 1, %s12
    %p200 = scmp.lt.s32.totalorder %s12, 3
    %p201 = pnand %p199, %p200
    %p202 = pneg %p201
    // Predicated region
    $region9: #{attention_block_forward.4} parent=5 // pred_check
      _
    $region10: #{attention_block_forward.4} parent=5 // pred_check_branch
      %204 = sbr.rel (%p201) target = $region12
    $region11: #{attention_block_forward.4} parent=5 // pred_region
      %s205 = ssub.s32 %s12, 1
      // Predicated region
      $region13: #{attention_block_forward.4} parent=11 // pred_check
        %p206 = pneg %p112
      $region14: #{attention_block_forward.4} parent=11 // pred_check_branch
        %208 = sbr.rel (%p206) target = $region16
      $region15: #{attention_block_forward.4} parent=11 // pred_region
        _
      $region16: #{attention_block_forward.4} parent=11 // pred_fallthru
        _
      // Predicated region
      $region17: #{attention_block_forward.4} parent=11 // pred_check
        %p209 = pneg %p133
      $region18: #{attention_block_forward.4} parent=11 // pred_check_branch
        %211 = sbr.rel (%p209) target = $region20
      $region19: #{attention_block_forward.4} parent=11 // pred_region
        _
      $region20: #{attention_block_forward.4} parent=11 // pred_fallthru
        _
    $region12: #{attention_block_forward.4} parent=5 // pred_fallthru
      _
    %p212 = scmp.lt.s32.totalorder %s12, 2
    // Predicated region
    $region21: #{attention_block_forward.4} parent=5 // pred_check
      %p213 = pneg %p212
    $region22: #{attention_block_forward.4} parent=5 // pred_check_branch
      %215 = sbr.rel (%p213) target = $region24
    $region23: #{attention_block_forward.4} parent=5 // pred_region
      // Predicated region
      $region25: #{attention_block_forward.4} parent=23 // pred_check
        %p216 = pneg %p55
      $region26: #{attention_block_forward.4} parent=23 // pred_check_branch
        %218 = sbr.rel (%p216) target = $region28
      $region27: #{attention_block_forward.4} parent=23 // pred_region
        %s219 = sadd.s32 %s20, %s21
        %s220 = smul.u32 2, %s219
        %p221 = scmp.lt.s32.totalorder %s19, 1
        %s222 = scalar_select %p221, %s19, 1
        %p223 = scmp.lt.s32.totalorder %s220, 1
        %s224 = scalar_select %p223, %s220, 1
        %s225 = smul.addr %s222, 2
        %s226 = sadd.s32 %s224, %s225
        %s227 = smul.addr %s226, 2
        %s228 = scalar_lea.vmem %s0, %s227
        %s229 = sadd.s32 %s20, %s21
        %s230 = smul.u32 2, %s229
      $region28: #{attention_block_forward.4} parent=23 // pred_fallthru
        _
      // Predicated region
      $region29: #{attention_block_forward.4} parent=23 // pred_check
        %p231 = pneg %p85
      $region30: #{attention_block_forward.4} parent=23 // pred_check_branch
        %233 = sbr.rel (%p231) target = $region32
      $region31: #{attention_block_forward.4} parent=23 // pred_region
        %s234 = sadd.s32 %s20, %s21
        %s235 = smul.u32 2, %s234
        %p236 = scmp.lt.s32.totalorder %s19, 1
        %s237 = scalar_select %p236, %s19, 1
        %p238 = scmp.lt.s32.totalorder %s235, 1
        %s239 = scalar_select %p238, %s235, 1
        %s240 = smul.addr %s237, 2
        %s241 = sadd.s32 %s239, %s240
        %s242 = smul.addr %s241, 2
        %s243 = scalar_lea.vmem %s1, %s242
        %s244 = sadd.s32 %s20, %s21
        %s245 = smul.u32 2, %s244
      $region32: #{attention_block_forward.4} parent=23 // pred_fallthru
        _
    $region24: #{attention_block_forward.4} parent=5 // pred_fallthru
      _
    %p246 = scmp.le.s32.totalorder 1, %s12
    %p247 = scmp.lt.s32.totalorder %s12, 3
    %p248 = pnand %p246, %p247
    %p249 = pneg %p248
    // Predicated region
    $region33: #{attention_block_forward.4} parent=5 // pred_check
      _
    $region34: #{attention_block_forward.4} parent=5 // pred_check_branch
      %251 = sbr.rel (%p248) target = $region36
    $region35: #{attention_block_forward.4} parent=5 // pred_region
      %s252 = ssub.s32 %s12, 1
      %s253 = sadd.s32 %s23, %s24
      %s254 = smul.u32 2, %s253
      %p255 = scmp.lt.s32.totalorder %s22, 1
      %s256 = scalar_select %p255, %s22, 1
      %p257 = scmp.lt.s32.totalorder %s254, 1
      %s258 = scalar_select %p257, %s254, 1
      %s259 = smul.addr %s256, 2
      %s260 = sadd.s32 %s258, %s259
      %s261 = smul.addr %s260, 2
      %s262 = scalar_lea.vmem %s0, %s261
      %p263 = pneg %p61
      %p264 = pneg %p58
      %s265 = sadd.s32 %s23, %s24
      %s266 = smul.u32 2, %s265
      %p267 = scmp.lt.s32.totalorder %s22, 1
      %s268 = scalar_select %p267, %s22, 1
      %p269 = scmp.lt.s32.totalorder %s266, 1
      %s270 = scalar_select %p269, %s266, 1
      %s271 = smul.addr %s268, 2
      %s272 = sadd.s32 %s270, %s271
      %s273 = smul.addr %s272, 2
      %s274 = scalar_lea.vmem %s1, %s273
      %p275 = pneg %p91
      %p276 = pneg %p88
      %p277 = pneg %p112
      %p278 = pneg %p109
      %p279 = pneg %p133
      %p280 = pneg %p130
      %p281 = pneg %p163
      %p282 = pneg %p160
      %s283 = sadd.s32 %s23, %s24
      %s284 = smul.u32 2, %s283
      %p285 = scmp.lt.s32.totalorder %s22, 1
      %s286 = scalar_select %p285, %s22, 1
      %p287 = scmp.lt.s32.totalorder %s284, 1
      %s288 = scalar_select %p287, %s284, 1
      %s289 = smul.addr %s286, 2
      %s290 = sadd.s32 %s288, %s289
      %s291 = scalar_lea.vmem %s4, %s290
      %p292 = pneg %p191
      %p293 = pneg %p188
      %p294 = scmp.lt.s32.totalorder %s22, 1
      %s295 = scalar_select %p294, %s22, 1
      %p296 = scmp.lt.s32.totalorder %s23, 0
      %s297 = scalar_select %p296, %s23, 0
      %s298 = sadd.s32 %s297, %s295
      %s299 = scalar_lea.vmem %s5, %s298
      %s300 = sadd.s32 %s23, %s24
      %s301 = smul.u32 2, %s300
      %p302 = scmp.lt.s32.totalorder %s22, 1
      %s303 = scalar_select %p302, %s22, 1
      %p304 = scmp.lt.s32.totalorder %s301, 1
      %s305 = scalar_select %p304, %s301, 1
      %s306 = smul.addr %s303, 2
      %s307 = sadd.s32 %s305, %s306
      %s308 = smul.addr %s307, 2
      %s309 = scalar_lea.vmem %s0, %s308
      %s310 = sadd.s32 %s23, %s24
      %s311 = smul.u32 2, %s310
      %s312 = sadd.s32 %s23, %s24
      %s313 = smul.u32 2, %s312
      %p314 = scmp.lt.s32.totalorder %s22, 1
      %s315 = scalar_select %p314, %s22, 1
      %p316 = scmp.lt.s32.totalorder %s313, 1
      %s317 = scalar_select %p316, %s313, 1
      %s318 = smul.addr %s315, 2
      %s319 = sadd.s32 %s317, %s318
      %s320 = smul.addr %s319, 2
      %s321 = scalar_lea.vmem %s1, %s320
      %s322 = sadd.s32 %s23, %s24
      %s323 = smul.u32 2, %s322
      %s324 = sadd.s32 %s23, %s24
      %s325 = smul.u32 2, %s324
      %p326 = scmp.lt.s32.totalorder %s22, 1
      %s327 = scalar_select %p326, %s22, 1
      %p328 = scmp.lt.s32.totalorder %s325, 1
      %s329 = scalar_select %p328, %s325, 1
      %s330 = smul.addr %s327, 2
      %s331 = sadd.s32 %s329, %s330
      %s332 = scalar_lea.vmem %s4, %s331
      %s333 = sadd.s32 %s23, %s24
      %s334 = smul.u32 2, %s333
      %p335 = scmp.lt.s32.totalorder %s22, 1
      %s336 = scalar_select %p335, %s22, 1
      %p337 = scmp.lt.s32.totalorder %s23, 0
      %s338 = scalar_select %p337, %s23, 0
      %s339 = sadd.s32 %s338, %s336
      %s340 = scalar_lea.vmem %s5, %s339
      %v342 = vld [vmem:[%s2] sm:$0xf]
      %v343 = vld [vmem:[%s309] sm:$0xf]
      %v344 = vunpack.c.l.bf16 %v343
      %v345 = vld [vmem:[%s321] sm:$0xf]
      %v346 = vunpack.c.l.bf16 %v345
      %348 = vset.pattern.permute.xlu0 0
      %349 = vperm.xlu0 %348, %v342
      %v350 = vpop.permute.xlu0 %349
      %v352 = vunpack.c.l.s4 839922192
      %v353 = vunpack.c.0.s8 %v352
      %v354 = vlaneseq
      %v355 = vshrl.u32 %v354, 7
      %v356 = vsub.s32 %v353, %v355
      %v357 = vrot.slane %v350, %v356
      %v359 = vmul.f32 %v344, %v357
      %360 = vset.pattern.permute.xlu0 1
      %361 = vperm.xlu0 %360, %v342
      %v362 = vpop.permute.xlu0 %361
      %v364 = vunpack.c.l.s4 839922192
      %v365 = vunpack.c.0.s8 %v364
      %v366 = vlaneseq
      %v367 = vshrl.u32 %v366, 7
      %v368 = vsub.s32 %v365, %v367
      %v369 = vrot.slane %v362, %v368
      %v371 = vmul.f32 %v346, %v369
      %v372 = vadd.f32 %v359, %v371
      %373 = vset.pattern.permute.xlu0 2
      %374 = vperm.xlu0 %373, %v342
      %v375 = vpop.permute.xlu0 %374
      %v377 = vunpack.c.l.s4 839922192
      %v378 = vunpack.c.0.s8 %v377
      %v379 = vlaneseq
      %v380 = vshrl.u32 %v379, 7
      %v381 = vsub.s32 %v378, %v380
      %v382 = vrot.slane %v375, %v381
      %v384 = vadd.f32 %v372, %v382
      %v385 = vmax.f32 %v384, 0.0
      %v386 = vld [vmem:[%s3] sm:$0x1]
      %v388 = vcombine.high %v385, %v385
      %v390 = vpack.c.bf16 %v385, %v385
      %v391 = vpack.c.bf16 %v388, %v388
      %vm392 = vcmask 31744
      %v394 = vsel %vm392, %v386, 0
      %vm396 = vcmask 1041408
      %v398 = vsel %vm396, %v390, 0
      %v401 = vsel %vm396, %v391, 0
      %403 = vmatprep.subr.bf16.mxu0 %v401
      %404 = vmatpush1.bf16.msra.mxu0 %v398
      %405 = vmatprep.subr.bf16.mxu0 0
      %406 = vmatpush1.bf16.msra.mxu0 0
      %407 = vmatprep.subr.bf16.mxu0 0
      %408 = vmatpush1.bf16.msra.mxu0 0
      %409 = vmatprep.subr.bf16.mxu0 0
      %410 = vmatpush1.bf16.msra.mxu0 0
      %411 = vmatprep.subr.bf16.mxu0 0
      %412 = vmatpush1.bf16.msra.mxu0 0
      %413 = vmatprep.subr.bf16.mxu0 0
      %414 = vmatpush1.bf16.msra.mxu0 0
      %415 = vmatprep.subr.bf16.mxu0 0
      %416 = vmatpush1.bf16.msra.mxu0 0
      %417 = vmatprep.subr.bf16.mxu0 0
      %418 = vmatpush1.bf16.msra.mxu0 0
      %419 = vmatprep.subr.bf16.mxu0 0
      %420 = vmatpush1.bf16.msra.mxu0 0
      %421 = vmatprep.subr.bf16.mxu0 0
      %422 = vmatpush1.bf16.msra.mxu0 0
      %423 = vmatprep.subr.bf16.mxu0 0
      %424 = vmatpush1.bf16.msra.mxu0 0
      %425 = vmatprep.subr.bf16.mxu0 0
      %426 = vmatpush1.bf16.msra.mxu0 0
      %427 = vmatprep.subr.bf16.mxu0 0
      %428 = vmatpush1.bf16.msra.mxu0 0
      %429 = vmatprep.subr.bf16.mxu0 0
      %430 = vmatpush1.bf16.msra.mxu0 0
      %431 = vmatprep.subr.bf16.mxu0 0
      %432 = vmatpush1.bf16.msra.mxu0 0
      %433 = vmatprep.subr.bf16.mxu0 0
      %434 = vmatpush1.bf16.msra.mxu0 0
      %435 = vmatprep.mubr.bf16.mxu0 0
      %436 = vmatmul.mubr.bf16.gmra.mrb[0].mxu0 %v394
      %v437 = vpop.f32.mrb[0].mxu0
      %v438 = vadd.f32 0.0, %v437
      %v439 = vpop.f32.mrb[0].mxu0
      %v440 = vadd.f32 0.0, %v439
      %v441 = vpop.f32.mrb[0].mxu0
      %v442 = vpop.f32.mrb[0].mxu0
      %443 = vdwg.mxu0
      %v446 = vcombine.low %v438, %v440
      %v448 = vunpack.c.l.s4 1966171168
      %v449 = vunpack.c.0.s8 %v448
      %v450 = vlaneseq
      %v451 = vshrl.u32 %v450, 7
      %v452 = vsub.s32 %v449, %v451
      %v453 = vrot.slane %v446, %v452
      %v455 = vunpack.c.l.s4 1966171168
      %v456 = vunpack.c.0.s8 %v455
      %v457 = vlaneseq
      %v458 = vshrl.u32 %v457, 7
      %v459 = vsub.s32 %v456, %v458
      %v460 = vrot.slane %v453, %v459
      %v462 = vlaneseq
      %vm463 = vcmp.ge.s32.totalorder %v462, 0
      %vm464 = vcmp.lt.s32.totalorder %v462, 256
      %vm465 = vmand %vm463, %vm464
      %466 = vst.msk [vmem:[%s332] sm:$0x3] %vm465, %v460
      %vm467 = vcmask 1040384
      %v468 = vsel %vm467, %v438, 0.0
      %v469 = vsel %vm467, %v440, 0.0
      %v470 = vadd.f32 %v468, %v469
      %471 = vadd.xlane.f32.xlu0 %v470
      %v472 = vpop.xlane.xlu0 %471
      %v473 = vmul.f32 %v438, %v438
      %v474 = vmul.f32 %v440, %v440
      %v475 = vsel %vm467, %v473, 0.0
      %v476 = vsel %vm467, %v474, 0.0
      %v477 = vadd.f32 %v475, %v476
      %478 = vadd.xlane.f32.xlu0 %v477
      %v479 = vpop.xlane.xlu0 %478
      %vm480 = vcmask 7168
      %v481 = vsel %vm480, %v472, %v479
      %p482 = scmp.eq.s32.totalorder %s24, 0
      // Predicated region
      $region37: #{attention_block_forward.4} parent=35 // pred_check
        %p483 = pneg %p482
      $region38: #{attention_block_forward.4} parent=35 // pred_check_branch
        %485 = sbr.rel (%p483) target = $region40
      $region39: #{attention_block_forward.4} parent=35 // pred_region
        %vm486 = vcmask 8192
        %487 = vst.msk [vmem:[%s340] sm:$0x1] %vm486, 0.0
      $region40: #{attention_block_forward.4} parent=35 // pred_fallthru
        _
      %v488 = vld [vmem:[%s340] sm:$0x1]
      %v489 = vadd.f32 %v488, %v481
      %vm490 = vcmask 8192
      %491 = vst.msk [vmem:[%s340] sm:$0x1] %vm490, %v489
      %s492 = sadd.s32 %s23, %s24
      %s493 = smul.u32 2, %s492
      %p494 = scmp.lt.s32.totalorder %s22, 1
      %s495 = scalar_select %p494, %s22, 1
      %p496 = scmp.lt.s32.totalorder %s493, 1
      %s497 = scalar_select %p496, %s493, 1
      %s498 = smul.addr %s495, 2
      %s499 = sadd.s32 %s497, %s498
      %s500 = scalar_lea.vmem %s4, %s499
      %p501 = scmp.lt.s32.totalorder %s22, 1
      %s502 = scalar_select %p501, %s22, 1
      %p503 = scmp.lt.s32.totalorder %s23, 0
      %s504 = scalar_select %p503, %s23, 0
      %s505 = sadd.s32 %s504, %s502
      %s506 = scalar_lea.vmem %s5, %s505
      // Predicated region
      $region41: #{attention_block_forward.4} parent=35 // pred_check
        %p507 = pneg %p160
      $region42: #{attention_block_forward.4} parent=35 // pred_check_branch
        %509 = sbr.rel (%p507) target = $region44
      $region43: #{attention_block_forward.4} parent=35 // pred_region
        %s510 = sadd.s32 %s23, %s24
        %s511 = smul.u32 2, %s510
      $region44: #{attention_block_forward.4} parent=35 // pred_fallthru
        _
      // Predicated region
      $region45: #{attention_block_forward.4} parent=35 // pred_check
        %p512 = pneg %p188
      $region46: #{attention_block_forward.4} parent=35 // pred_check_branch
        %514 = sbr.rel (%p512) target = $region48
      $region47: #{attention_block_forward.4} parent=35 // pred_region
        _
      $region48: #{attention_block_forward.4} parent=35 // pred_fallthru
        _
    $region36: #{attention_block_forward.4} parent=5 // pred_fallthru
      _
    %p515 = scmp.le.s32.totalorder 2, %s12
    // Predicated region
    $region49: #{attention_block_forward.4} parent=5 // pred_check
      %p516 = pneg %p515
    $region50: #{attention_block_forward.4} parent=5 // pred_check_branch
      %518 = sbr.rel (%p516) target = $region52
    $region51: #{attention_block_forward.4} parent=5 // pred_region
      %s519 = ssub.s32 %s12, 2
      // Predicated region
      $region53: #{attention_block_forward.4} parent=51 // pred_check
        %p520 = pneg %p166
      $region54: #{attention_block_forward.4} parent=51 // pred_check_branch
        %522 = sbr.rel (%p520) target = $region56
      $region55: #{attention_block_forward.4} parent=51 // pred_region
        %s523 = sadd.s32 %s26, %s27
        %s524 = smul.u32 2, %s523
        %p525 = scmp.lt.s32.totalorder %s25, 1
        %s526 = scalar_select %p525, %s25, 1
        %p527 = scmp.lt.s32.totalorder %s524, 1
        %s528 = scalar_select %p527, %s524, 1
        %s529 = smul.addr %s526, 2
        %s530 = sadd.s32 %s528, %s529
        %s531 = scalar_lea.vmem %s4, %s530
      $region56: #{attention_block_forward.4} parent=51 // pred_fallthru
        _
      // Predicated region
      $region57: #{attention_block_forward.4} parent=51 // pred_check
        %p532 = pneg %p194
      $region58: #{attention_block_forward.4} parent=51 // pred_check_branch
        %534 = sbr.rel (%p532) target = $region60
      $region59: #{attention_block_forward.4} parent=51 // pred_region
        %p535 = scmp.lt.s32.totalorder %s25, 1
        %s536 = scalar_select %p535, %s25, 1
        %p537 = scmp.lt.s32.totalorder %s26, 0
        %s538 = scalar_select %p537, %s26, 0
        %s539 = sadd.s32 %s538, %s536
        %s540 = scalar_lea.vmem %s5, %s539
      $region60: #{attention_block_forward.4} parent=51 // pred_fallthru
        _
    $region52: #{attention_block_forward.4} parent=5 // pred_fallthru
      _
  $region6: #{attention_block_forward.4} parent=0 // loop_footer
    %s16 = sadd.s32 1, %s12
  $region7: #{attention_block_forward.4} parent=0 // loop_footer_branch
    %11 = sbr.rel target = $region3
  $region8: #{attention_block_forward.4} parent=0 // loop_exit
    _

// kernel: attention_block_forward.3
$region0: #{attention_block_forward.3}
  #allocation0 [shape = 'u32[]', space=smem, size = 0x4, offset = 0x4, fixed_abs, tag = 'smem constant byte address 0x4 - core index']
  #allocation1 [shape = 'u32[144,128]{1,0:T(1,128)}', space=vmem, size = 0x12000, scoped, tag = 'internal scratch']
  %s0 = inlined_call_operand.vmem [shape: f32[2,16,256], index: 0, kind: input, shape index: {}]
  %s1 = inlined_call_operand.vmem [shape: f32[2,8,256], index: 1, kind: input, shape index: {}]
  %s2 = inlined_call_operand.vmem [shape: bf16[4,16], index: 2, kind: input, shape index: {}]
  %s3 = inlined_call_operand.vmem [shape: bf16[4,8], index: 3, kind: input, shape index: {}]
  %s4 = inlined_call_operand.vmem [shape: bf16[2,4,256], index: 4, kind: output, shape index: {0}]
  %s5 = inlined_call_operand.vmem [shape: bf16[2,4,256], index: 5, kind: output, shape index: {1}]
  %s6 = inlined_call_operand.vmem [shape: f32[2,1,4,4], index: 6, kind: output, shape index: {2}]
  %7 = xla_tuple %s4, %s5, %s6
  %s8 = sld [smem:[#allocation0]]
  $region69: #{attention_block_forward.3} parent=0
    _
  %s10 = ssub.s32 1, %s8
  %s11 = scalar_select 0, %s10, %s8
  loop: start=0, step=1, limit=4
  $region2: #{attention_block_forward.3} parent=0 // loop_pre_header
    _
  $region3: #{attention_block_forward.3} parent=0 // loop_header
    %s13 = sphi 0, %s17
    %p14 = scmp.ge.s32.totalorder %s13, 4
    %s20 = sphi 0, %s39
    %s21 = sphi 0, %s35
    %s22 = sphi 0, %s31
    %s23 = sphi 0, %s20
    %s24 = sphi 0, %s21
    %s25 = sphi 0, %s22
    %s26 = sphi 0, %s23
    %s27 = sphi 0, %s24
    %s28 = sphi 0, %s25
    %s46 = sphi 0, %s48
    %s49 = sphi 0, %s46
    %s50 = sphi 0, %s49
    %s66 = sphi 0, %s50
    %s76 = sphi 0, %s78
    %s79 = sphi 0, %s76
    %s80 = sphi 0, %s79
    %s96 = sphi 0, %s80
    %s100 = sphi 0, %s100
    %s102 = sphi 0, %s100
    %s103 = sphi 0, %s102
    %s117 = sphi 0, %s103
    %s121 = sphi 0, %s121
    %s123 = sphi 0, %s121
    %s124 = sphi 0, %s123
    %s138 = sphi 0, %s124
    %s148 = sphi 0, %s150
    %s151 = sphi 0, %s148
    %s152 = sphi 0, %s151
    %s168 = sphi 0, %s152
    %s178 = sphi 0, %s180
    %s181 = sphi 0, %s178
    %s182 = sphi 0, %s181
    %s198 = sphi 0, %s182
    %s206 = sphi 0, %s208
    %s209 = sphi 0, %s206
    %s210 = sphi 0, %s209
    %s226 = sphi 0, %s210
  $region4: #{attention_block_forward.3} parent=0 // loop_header_branch
    %16 = sbr.rel (%p14) target = $region8
  $region5: #{attention_block_forward.3} parent=0 // loop_body
    %s18 = ssub.s32 %s13, 1
    %s19 = ssub.s32 %s13, 2
    %s29 = sadd.s32 1, %s22
    %p30 = scmp.ge.s32.totalorder %s29, 1
    %s31 = scalar_select %p30, 0, %s29
    %s32 = sadd.s32 1, %s21
    %s33 = scalar_select %p30, %s32, %s21
    %p34 = scmp.ge.s32.totalorder %s33, 1
    %s35 = scalar_select %p34, 0, %s33
    %s36 = sadd.s32 1, %s20
    %s37 = scalar_select %p34, %s36, %s20
    %p38 = scmp.ge.s32.totalorder %s37, 2
    %s39 = scalar_select %p38, 0, %s37
    %s40 = sadd.s32 %s21, %s22
    %s41 = sadd.s32 %s35, %s31
    %s42 = ssub.s32 %s20, %s39
    %s43 = ssub.s32 %s40, %s41
    %s44 = sor.u32 %s42, %s43
    %p45 = scmp.eq.s32.totalorder %s44, 0
    %s47 = sadd.s32 %s46, 1
    %s48 = scalar_select %p45, %s46, %s47
    %p51 = pneg %p45
    %p52 = scmp.eq.s32.totalorder %s13, 1
    %p53 = por %p51, %p52
    %p54 = scmp.ne.s32.totalorder %s46, %s49
    %p55 = scmp.eq.s32.totalorder %s13, 0
    %p56 = por %p54, %p55
    %p57 = scmp.ne.s32.totalorder %s46, %s49
    %p58 = scmp.eq.s32.totalorder %s18, 1
    %p59 = por %p57, %p58
    %p60 = scmp.ne.s32.totalorder %s49, %s50
    %p61 = scmp.eq.s32.totalorder %s18, 0
    %p62 = por %p60, %p61
    %p63 = scmp.ne.s32.totalorder %s49, %s50
    %p64 = scmp.eq.s32.totalorder %s19, 1
    %p65 = por %p63, %p64
    %p67 = scmp.ne.s32.totalorder %s50, %s66
    %p68 = scmp.eq.s32.totalorder %s19, 0
    %p69 = por %p67, %p68
    %s70 = sadd.s32 %s21, %s22
    %s71 = sadd.s32 %s35, %s31
    %s72 = ssub.s32 %s20, %s39
    %s73 = ssub.s32 %s70, %s71
    %s74 = sor.u32 %s72, %s73
    %p75 = scmp.eq.s32.totalorder %s74, 0
    %s77 = sadd.s32 %s76, 1
    %s78 = scalar_select %p75, %s76, %s77
    %p81 = pneg %p75
    %p82 = scmp.eq.s32.totalorder %s13, 1
    %p83 = por %p81, %p82
    %p84 = scmp.ne.s32.totalorder %s76, %s79
    %p85 = scmp.eq.s32.totalorder %s13, 0
    %p86 = por %p84, %p85
    %p87 = scmp.ne.s32.totalorder %s76, %s79
    %p88 = scmp.eq.s32.totalorder %s18, 1
    %p89 = por %p87, %p88
    %p90 = scmp.ne.s32.totalorder %s79, %s80
    %p91 = scmp.eq.s32.totalorder %s18, 0
    %p92 = por %p90, %p91
    %p93 = scmp.ne.s32.totalorder %s79, %s80
    %p94 = scmp.eq.s32.totalorder %s19, 1
    %p95 = por %p93, %p94
    %p97 = scmp.ne.s32.totalorder %s80, %s96
    %p98 = scmp.eq.s32.totalorder %s19, 0
    %p99 = por %p97, %p98
    %s101 = sadd.s32 %s100, 1
    %p104 = scmp.eq.s32.totalorder %s13, 1
    %p105 = scmp.ne.s32.totalorder %s100, %s102
    %p106 = scmp.eq.s32.totalorder %s13, 0
    %p107 = por %p105, %p106
    %p108 = scmp.ne.s32.totalorder %s100, %s102
    %p109 = scmp.eq.s32.totalorder %s18, 1
    %p110 = por %p108, %p109
    %p111 = scmp.ne.s32.totalorder %s102, %s103
    %p112 = scmp.eq.s32.totalorder %s18, 0
    %p113 = por %p111, %p112
    %p114 = scmp.ne.s32.totalorder %s102, %s103
    %p115 = scmp.eq.s32.totalorder %s19, 1
    %p116 = por %p114, %p115
    %p118 = scmp.ne.s32.totalorder %s103, %s117
    %p119 = scmp.eq.s32.totalorder %s19, 0
    %p120 = por %p118, %p119
    %s122 = sadd.s32 %s121, 1
    %p125 = scmp.eq.s32.totalorder %s13, 1
    %p126 = scmp.ne.s32.totalorder %s121, %s123
    %p127 = scmp.eq.s32.totalorder %s13, 0
    %p128 = por %p126, %p127
    %p129 = scmp.ne.s32.totalorder %s121, %s123
    %p130 = scmp.eq.s32.totalorder %s18, 1
    %p131 = por %p129, %p130
    %p132 = scmp.ne.s32.totalorder %s123, %s124
    %p133 = scmp.eq.s32.totalorder %s18, 0
    %p134 = por %p132, %p133
    %p135 = scmp.ne.s32.totalorder %s123, %s124
    %p136 = scmp.eq.s32.totalorder %s19, 1
    %p137 = por %p135, %p136
    %p139 = scmp.ne.s32.totalorder %s124, %s138
    %p140 = scmp.eq.s32.totalorder %s19, 0
    %p141 = por %p139, %p140
    %s142 = sadd.s32 %s21, %s22
    %s143 = sadd.s32 %s35, %s31
    %s144 = ssub.s32 %s20, %s39
    %s145 = ssub.s32 %s142, %s143
    %s146 = sor.u32 %s144, %s145
    %p147 = scmp.eq.s32.totalorder %s146, 0
    %s149 = sadd.s32 %s148, 1
    %s150 = scalar_select %p147, %s148, %s149
    %p153 = pneg %p147
    %p154 = scmp.eq.s32.totalorder %s13, 1
    %p155 = por %p153, %p154
    %p156 = scmp.ne.s32.totalorder %s148, %s151
    %p157 = scmp.eq.s32.totalorder %s13, 0
    %p158 = por %p156, %p157
    %p159 = scmp.ne.s32.totalorder %s148, %s151
    %p160 = scmp.eq.s32.totalorder %s18, 1
    %p161 = por %p159, %p160
    %p162 = scmp.ne.s32.totalorder %s151, %s152
    %p163 = scmp.eq.s32.totalorder %s18, 0
    %p164 = por %p162, %p163
    %p165 = scmp.ne.s32.totalorder %s151, %s152
    %p166 = scmp.eq.s32.totalorder %s19, 1
    %p167 = por %p165, %p166
    %p169 = scmp.ne.s32.totalorder %s152, %s168
    %p170 = scmp.eq.s32.totalorder %s19, 0
    %p171 = por %p169, %p170
    %s172 = sadd.s32 %s21, %s22
    %s173 = sadd.s32 %s35, %s31
    %s174 = ssub.s32 %s20, %s39
    %s175 = ssub.s32 %s172, %s173
    %s176 = sor.u32 %s174, %s175
    %p177 = scmp.eq.s32.totalorder %s176, 0
    %s179 = sadd.s32 %s178, 1
    %s180 = scalar_select %p177, %s178, %s179
    %p183 = pneg %p177
    %p184 = scmp.eq.s32.totalorder %s13, 1
    %p185 = por %p183, %p184
    %p186 = scmp.ne.s32.totalorder %s178, %s181
    %p187 = scmp.eq.s32.totalorder %s13, 0
    %p188 = por %p186, %p187
    %p189 = scmp.ne.s32.totalorder %s178, %s181
    %p190 = scmp.eq.s32.totalorder %s18, 1
    %p191 = por %p189, %p190
    %p192 = scmp.ne.s32.totalorder %s181, %s182
    %p193 = scmp.eq.s32.totalorder %s18, 0
    %p194 = por %p192, %p193
    %p195 = scmp.ne.s32.totalorder %s181, %s182
    %p196 = scmp.eq.s32.totalorder %s19, 1
    %p197 = por %p195, %p196
    %p199 = scmp.ne.s32.totalorder %s182, %s198
    %p200 = scmp.eq.s32.totalorder %s19, 0
    %p201 = por %p199, %p200
    %s202 = ssub.s32 %s20, %s39
    %s203 = ssub.s32 %s21, %s35
    %s204 = sor.u32 %s202, %s203
    %p205 = scmp.eq.s32.totalorder %s204, 0
    %s207 = sadd.s32 %s206, 1
    %s208 = scalar_select %p205, %s206, %s207
    %p211 = pneg %p205
    %p212 = scmp.eq.s32.totalorder %s13, 1
    %p213 = por %p211, %p212
    %p214 = scmp.ne.s32.totalorder %s206, %s209
    %p215 = scmp.eq.s32.totalorder %s13, 0
    %p216 = por %p214, %p215
    %p217 = scmp.ne.s32.totalorder %s206, %s209
    %p218 = scmp.eq.s32.totalorder %s18, 1
    %p219 = por %p217, %p218
    %p220 = scmp.ne.s32.totalorder %s209, %s210
    %p221 = scmp.eq.s32.totalorder %s18, 0
    %p222 = por %p220, %p221
    %p223 = scmp.ne.s32.totalorder %s209, %s210
    %p224 = scmp.eq.s32.totalorder %s19, 1
    %p225 = por %p223, %p224
    %p227 = scmp.ne.s32.totalorder %s210, %s226
    %p228 = scmp.eq.s32.totalorder %s19, 0
    %p229 = por %p227, %p228
    %p230 = scmp.le.s32.totalorder 1, %s13
    %p231 = scmp.lt.s32.totalorder %s13, 3
    %p232 = pnand %p230, %p231
    %p233 = pneg %p232
    // Predicated region
    $region9: #{attention_block_forward.3} parent=5 // pred_check
      _
    $region10: #{attention_block_forward.3} parent=5 // pred_check_branch
      %235 = sbr.rel (%p232) target = $region12
    $region11: #{attention_block_forward.3} parent=5 // pred_region
      %s236 = ssub.s32 %s13, 1
      // Predicated region
      $region13: #{attention_block_forward.3} parent=11 // pred_check
        %p237 = pneg %p113
      $region14: #{attention_block_forward.3} parent=11 // pred_check_branch
        %239 = sbr.rel (%p237) target = $region16
      $region15: #{attention_block_forward.3} parent=11 // pred_region
        _
      $region16: #{attention_block_forward.3} parent=11 // pred_fallthru
        _
      // Predicated region
      $region17: #{attention_block_forward.3} parent=11 // pred_check
        %p240 = pneg %p134
      $region18: #{attention_block_forward.3} parent=11 // pred_check_branch
        %242 = sbr.rel (%p240) target = $region20
      $region19: #{attention_block_forward.3} parent=11 // pred_region
        _
      $region20: #{attention_block_forward.3} parent=11 // pred_fallthru
        _
    $region12: #{attention_block_forward.3} parent=5 // pred_fallthru
      _
    %p243 = scmp.lt.s32.totalorder %s13, 2
    // Predicated region
    $region21: #{attention_block_forward.3} parent=5 // pred_check
      %p244 = pneg %p243
    $region22: #{attention_block_forward.3} parent=5 // pred_check_branch
      %246 = sbr.rel (%p244) target = $region24
    $region23: #{attention_block_forward.3} parent=5 // pred_region
      // Predicated region
      $region25: #{attention_block_forward.3} parent=23 // pred_check
        %p247 = pneg %p56
      $region26: #{attention_block_forward.3} parent=23 // pred_check_branch
        %249 = sbr.rel (%p247) target = $region28
      $region27: #{attention_block_forward.3} parent=23 // pred_region
        %s250 = sadd.s32 %s21, %s22
        %s251 = smul.u32 2, %s250
        %p252 = scmp.lt.s32.totalorder %s20, 1
        %s253 = scalar_select %p252, %s20, 1
        %p254 = scmp.lt.s32.totalorder %s251, 1
        %s255 = scalar_select %p254, %s251, 1
        %s256 = smul.addr %s253, 4
        %s257 = sadd.s32 %s255, %s256
        %s258 = smul.addr %s257, 8
        %s259 = scalar_lea.vmem %s0, %s258
        %s260 = sadd.s32 %s21, %s22
        %s261 = smul.u32 2, %s260
      $region28: #{attention_block_forward.3} parent=23 // pred_fallthru
        _
      // Predicated region
      $region29: #{attention_block_forward.3} parent=23 // pred_check
        %p262 = pneg %p86
      $region30: #{attention_block_forward.3} parent=23 // pred_check_branch
        %264 = sbr.rel (%p262) target = $region32
      $region31: #{attention_block_forward.3} parent=23 // pred_region
        %s265 = sadd.s32 %s21, %s22
        %s266 = smul.u32 2, %s265
        %p267 = scmp.lt.s32.totalorder %s20, 1
        %s268 = scalar_select %p267, %s20, 1
        %p269 = scmp.lt.s32.totalorder %s266, 1
        %s270 = scalar_select %p269, %s266, 1
        %s271 = smul.addr %s268, 2
        %s272 = sadd.s32 %s270, %s271
        %s273 = smul.addr %s272, 8
        %s274 = scalar_lea.vmem %s1, %s273
        %s275 = sadd.s32 %s21, %s22
        %s276 = smul.u32 2, %s275
      $region32: #{attention_block_forward.3} parent=23 // pred_fallthru
        _
    $region24: #{attention_block_forward.3} parent=5 // pred_fallthru
      _
    %p277 = scmp.le.s32.totalorder 1, %s13
    %p278 = scmp.lt.s32.totalorder %s13, 3
    %p279 = pnand %p277, %p278
    %p280 = pneg %p279
    // Predicated region
    $region33: #{attention_block_forward.3} parent=5 // pred_check
      _
    $region34: #{attention_block_forward.3} parent=5 // pred_check_branch
      %282 = sbr.rel (%p279) target = $region36
    $region35: #{attention_block_forward.3} parent=5 // pred_region
      %s283 = ssub.s32 %s13, 1
      %s284 = sadd.s32 %s24, %s25
      %s285 = smul.u32 2, %s284
      %p286 = scmp.lt.s32.totalorder %s23, 1
      %s287 = scalar_select %p286, %s23, 1
      %p288 = scmp.lt.s32.totalorder %s285, 1
      %s289 = scalar_select %p288, %s285, 1
      %s290 = smul.addr %s287, 4
      %s291 = sadd.s32 %s289, %s290
      %s292 = smul.addr %s291, 8
      %s293 = scalar_lea.vmem %s0, %s292
      %p294 = pneg %p62
      %p295 = pneg %p59
      %s296 = sadd.s32 %s24, %s25
      %s297 = smul.u32 2, %s296
      %p298 = scmp.lt.s32.totalorder %s23, 1
      %s299 = scalar_select %p298, %s23, 1
      %p300 = scmp.lt.s32.totalorder %s297, 1
      %s301 = scalar_select %p300, %s297, 1
      %s302 = smul.addr %s299, 2
      %s303 = sadd.s32 %s301, %s302
      %s304 = smul.addr %s303, 8
      %s305 = scalar_lea.vmem %s1, %s304
      %p306 = pneg %p92
      %p307 = pneg %p89
      %p308 = pneg %p113
      %p309 = pneg %p110
      %p310 = pneg %p134
      %p311 = pneg %p131
      %p312 = pneg %p164
      %p313 = pneg %p161
      %s314 = sadd.s32 %s24, %s25
      %s315 = smul.u32 2, %s314
      %p316 = scmp.lt.s32.totalorder %s23, 1
      %s317 = scalar_select %p316, %s23, 1
      %p318 = scmp.lt.s32.totalorder %s315, 1
      %s319 = scalar_select %p318, %s315, 1
      %s320 = smul.addr %s317, 2
      %s321 = sadd.s32 %s319, %s320
      %s322 = smul.addr %s321, 2
      %s323 = scalar_lea.vmem %s4, %s322
      %p324 = pneg %p194
      %p325 = pneg %p191
      %s326 = sadd.s32 %s24, %s25
      %s327 = smul.u32 2, %s326
      %p328 = scmp.lt.s32.totalorder %s23, 1
      %s329 = scalar_select %p328, %s23, 1
      %p330 = scmp.lt.s32.totalorder %s327, 1
      %s331 = scalar_select %p330, %s327, 1
      %s332 = smul.addr %s329, 2
      %s333 = sadd.s32 %s331, %s332
      %s334 = smul.addr %s333, 2
      %s335 = scalar_lea.vmem %s5, %s334
      %p336 = pneg %p222
      %p337 = pneg %p219
      %p338 = scmp.lt.s32.totalorder %s23, 1
      %s339 = scalar_select %p338, %s23, 1
      %p340 = scmp.lt.s32.totalorder %s24, 0
      %s341 = scalar_select %p340, %s24, 0
      %s342 = sadd.s32 %s341, %s339
      %s343 = smul.addr %s342, 4
      %s344 = scalar_lea.vmem %s6, %s343
      %s345 = sadd.s32 %s24, %s25
      %s346 = smul.u32 2, %s345
      %p347 = scmp.lt.s32.totalorder %s23, 1
      %s348 = scalar_select %p347, %s23, 1
      %p349 = scmp.lt.s32.totalorder %s346, 1
      %s350 = scalar_select %p349, %s346, 1
      %s351 = smul.addr %s348, 4
      %s352 = sadd.s32 %s350, %s351
      %s353 = smul.addr %s352, 8
      %s354 = scalar_lea.vmem %s0, %s353
      %s355 = sadd.s32 %s24, %s25
      %s356 = smul.u32 2, %s355
      %s357 = sadd.s32 %s24, %s25
      %s358 = smul.u32 2, %s357
      %p359 = scmp.lt.s32.totalorder %s23, 1
      %s360 = scalar_select %p359, %s23, 1
      %p361 = scmp.lt.s32.totalorder %s358, 1
      %s362 = scalar_select %p361, %s358, 1
      %s363 = smul.addr %s360, 2
      %s364 = sadd.s32 %s362, %s363
      %s365 = smul.addr %s364, 8
      %s366 = scalar_lea.vmem %s1, %s365
      %s367 = sadd.s32 %s24, %s25
      %s368 = smul.u32 2, %s367
      %s369 = sadd.s32 %s24, %s25
      %s370 = smul.u32 2, %s369
      %p371 = scmp.lt.s32.totalorder %s23, 1
      %s372 = scalar_select %p371, %s23, 1
      %p373 = scmp.lt.s32.totalorder %s370, 1
      %s374 = scalar_select %p373, %s370, 1
      %s375 = smul.addr %s372, 2
      %s376 = sadd.s32 %s374, %s375
      %s377 = smul.addr %s376, 2
      %s378 = scalar_lea.vmem %s4, %s377
      %s379 = sadd.s32 %s24, %s25
      %s380 = smul.u32 2, %s379
      %s381 = sadd.s32 %s24, %s25
      %s382 = smul.u32 2, %s381
      %p383 = scmp.lt.s32.totalorder %s23, 1
      %s384 = scalar_select %p383, %s23, 1
      %p385 = scmp.lt.s32.totalorder %s382, 1
      %s386 = scalar_select %p385, %s382, 1
      %s387 = smul.addr %s384, 2
      %s388 = sadd.s32 %s386, %s387
      %s389 = smul.addr %s388, 2
      %s390 = scalar_lea.vmem %s5, %s389
      %s391 = sadd.s32 %s24, %s25
      %s392 = smul.u32 2, %s391
      %p393 = scmp.lt.s32.totalorder %s23, 1
      %s394 = scalar_select %p393, %s23, 1
      %p395 = scmp.lt.s32.totalorder %s24, 0
      %s396 = scalar_select %p395, %s24, 0
      %s397 = sadd.s32 %s396, %s394
      %s398 = smul.addr %s397, 4
      %s399 = scalar_lea.vmem %s6, %s398
      %v401 = vld [vmem:[%s2] sm:$0x3]
      %v402 = vld [vmem:[%s3] sm:$0x3]
      %v403 = vld [vmem:[%s354] sm:$0xff]
      %v404 = vld [vmem:[%s354 + $0x8] sm:$0xff]
      %v405 = vld [vmem:[%s354 + $0x10] sm:$0xff]
      %v406 = vld [vmem:[%s354 + $0x18] sm:$0xff]
      %v407 = vpack.c.bf16 %v405, %v403
      %v408 = vpack.c.bf16 %v406, %v404
      %vm409 = vcmask 130048
      %v411 = vsel %vm409, %v401, 0
      %413 = vmatprep.subr.bf16.mxu0 %v408
      %414 = vmatpush1.bf16.msra.mxu0 %v407
      %415 = vmatprep.subr.bf16.mxu0 0
      %416 = vmatpush1.bf16.msra.mxu0 0
      %417 = vmatprep.subr.bf16.mxu0 0
      %418 = vmatpush1.bf16.msra.mxu0 0
      %419 = vmatprep.subr.bf16.mxu0 0
      %420 = vmatpush1.bf16.msra.mxu0 0
      %421 = vmatprep.subr.bf16.mxu0 0
      %422 = vmatpush1.bf16.msra.mxu0 0
      %423 = vmatprep.subr.bf16.mxu0 0
      %424 = vmatpush1.bf16.msra.mxu0 0
      %425 = vmatprep.subr.bf16.mxu0 0
      %426 = vmatpush1.bf16.msra.mxu0 0
      %427 = vmatprep.subr.bf16.mxu0 0
      %428 = vmatpush1.bf16.msra.mxu0 0
      %429 = vmatprep.subr.bf16.mxu0 0
      %430 = vmatpush1.bf16.msra.mxu0 0
      %431 = vmatprep.subr.bf16.mxu0 0
      %432 = vmatpush1.bf16.msra.mxu0 0
      %433 = vmatprep.subr.bf16.mxu0 0
      %434 = vmatpush1.bf16.msra.mxu0 0
      %435 = vmatprep.subr.bf16.mxu0 0
      %436 = vmatpush1.bf16.msra.mxu0 0
      %437 = vmatprep.subr.bf16.mxu0 0
      %438 = vmatpush1.bf16.msra.mxu0 0
      %439 = vmatprep.subr.bf16.mxu0 0
      %440 = vmatpush1.bf16.msra.mxu0 0
      %441 = vmatprep.subr.bf16.mxu0 0
      %442 = vmatpush1.bf16.msra.mxu0 0
      %443 = vmatprep.subr.bf16.mxu0 0
      %444 = vmatpush1.bf16.msra.mxu0 0
      %445 = vmatprep.mubr.bf16.mxu0 0
      %446 = vmatmul.mubr.bf16.gmra.mrb[0].mxu0 %v411
      %v447 = vpop.f32.mrb[0].mxu0
      %v448 = vadd.f32 0.0, %v447
      %v449 = vpop.f32.mrb[0].mxu0
      %v450 = vadd.f32 0.0, %v449
      %v451 = vpop.f32.mrb[0].mxu0
      %v452 = vpop.f32.mrb[0].mxu0
      %453 = vdwg.mxu0
      %v454 = vld [vmem:[%s366] sm:$0xff]
      %v455 = vld [vmem:[%s366 + $0x8] sm:$0xff]
      %v456 = vpack.c.bf16 %v454, %v454
      %v457 = vpack.c.bf16 %v455, %v455
      %vm458 = vcmask 64512
      %v460 = vsel %vm458, %v402, 0
      %vm462 = vcmask 1043456
      %v464 = vsel %vm462, %v456, 0
      %v467 = vsel %vm462, %v457, 0
      %469 = vmatprep.subr.bf16.mxu0 %v467
      %470 = vmatpush1.bf16.msra.mxu0 %v464
      %471 = vmatprep.subr.bf16.mxu0 0
      %472 = vmatpush1.bf16.msra.mxu0 0
      %473 = vmatprep.subr.bf16.mxu0 0
      %474 = vmatpush1.bf16.msra.mxu0 0
      %475 = vmatprep.subr.bf16.mxu0 0
      %476 = vmatpush1.bf16.msra.mxu0 0
      %477 = vmatprep.subr.bf16.mxu0 0
      %478 = vmatpush1.bf16.msra.mxu0 0
      %479 = vmatprep.subr.bf16.mxu0 0
      %480 = vmatpush1.bf16.msra.mxu0 0
      %481 = vmatprep.subr.bf16.mxu0 0
      %482 = vmatpush1.bf16.msra.mxu0 0
      %483 = vmatprep.subr.bf16.mxu0 0
      %484 = vmatpush1.bf16.msra.mxu0 0
      %485 = vmatprep.subr.bf16.mxu0 0
      %486 = vmatpush1.bf16.msra.mxu0 0
      %487 = vmatprep.subr.bf16.mxu0 0
      %488 = vmatpush1.bf16.msra.mxu0 0
      %489 = vmatprep.subr.bf16.mxu0 0
      %490 = vmatpush1.bf16.msra.mxu0 0
      %491 = vmatprep.subr.bf16.mxu0 0
      %492 = vmatpush1.bf16.msra.mxu0 0
      %493 = vmatprep.subr.bf16.mxu0 0
      %494 = vmatpush1.bf16.msra.mxu0 0
      %495 = vmatprep.subr.bf16.mxu0 0
      %496 = vmatpush1.bf16.msra.mxu0 0
      %497 = vmatprep.subr.bf16.mxu0 0
      %498 = vmatpush1.bf16.msra.mxu0 0
      %499 = vmatprep.subr.bf16.mxu0 0
      %500 = vmatpush1.bf16.msra.mxu0 0
      %501 = vmatprep.mubr.bf16.mxu0 0
      %502 = vmatmul.mubr.bf16.gmra.mrb[0].mxu0 %v460
      %v503 = vpop.f32.mrb[0].mxu0
      %v504 = vadd.f32 0.0, %v503
      %v505 = vpop.f32.mrb[0].mxu0
      %v506 = vadd.f32 0.0, %v505
      %v507 = vpop.f32.mrb[0].mxu0
      %v508 = vpop.f32.mrb[0].mxu0
      %509 = vdwg.mxu0
      %v510 = vpack.c.bf16 %v448, %v448
      %v511 = vpack.c.bf16 %v450, %v450
      %v514 = vcombine.low %v510, %v511
      %v516 = vunpack.c.l.s4 1983009808
      %v517 = vunpack.c.0.s8 %v516
      %v518 = vlaneseq
      %v519 = vshrl.u32 %v518, 7
      %v520 = vsub.s32 %v517, %v519
      %v521 = vrot.slane %v514, %v520
      %523 = vst [vmem:[%s378] sm:$0xf] %v521
      %v524 = vpack.c.bf16 %v504, %v504
      %v525 = vpack.c.bf16 %v506, %v506
      %v528 = vcombine.low %v524, %v525
      %v530 = vunpack.c.l.s4 1983009808
      %v531 = vunpack.c.0.s8 %v530
      %v532 = vlaneseq
      %v533 = vshrl.u32 %v532, 7
      %v534 = vsub.s32 %v531, %v533
      %v535 = vrot.slane %v528, %v534
      %537 = vst [vmem:[%s390] sm:$0xf] %v535
      %v538 = vsel %vm462, %v448, 0.0
      %v539 = vsel %vm462, %v450, 0.0
      %v540 = vadd.f32 %v538, %v539
      %541 = vadd.xlane.f32.xlu0 %v540
      %v542 = vpop.xlane.xlu0 %541
      %v543 = vmul.f32 %v448, %v448
      %v544 = vmul.f32 %v450, %v450
      %v545 = vsel %vm462, %v543, 0.0
      %v546 = vsel %vm462, %v544, 0.0
      %v547 = vadd.f32 %v545, %v546
      %548 = vadd.xlane.f32.xlu0 %v547
      %v549 = vpop.xlane.xlu0 %548
      %v550 = vsel %vm462, %v504, 0.0
      %v551 = vsel %vm462, %v506, 0.0
      %v552 = vadd.f32 %v550, %v551
      %553 = vadd.xlane.f32.xlu0 %v552
      %v554 = vpop.xlane.xlu0 %553
      %v555 = vmul.f32 %v504, %v504
      %v556 = vmul.f32 %v506, %v506
      %v557 = vsel %vm462, %v555, 0.0
      %v558 = vsel %vm462, %v556, 0.0
      %v559 = vadd.f32 %v557, %v558
      %560 = vadd.xlane.f32.xlu0 %v559
      %v561 = vpop.xlane.xlu0 %560
      %vm562 = vcmask 7168
      %v563 = vsel %vm562, %v542, %v549
      %vm564 = vcmask 15360
      %v565 = vsel %vm564, %v563, %v554
      %vm566 = vcmask 23552
      %v567 = vsel %vm566, %v565, %v561
      %p568 = scmp.eq.s32.totalorder %s25, 0
      // Predicated region
      $region37: #{attention_block_forward.3} parent=35 // pred_check
        %p569 = pneg %p568
      $region38: #{attention_block_forward.3} parent=35 // pred_check_branch
        %571 = sbr.rel (%p569) target = $region40
      $region39: #{attention_block_forward.3} parent=35 // pred_region
        %vm572 = vcmask 27648
        %573 = vst.msk [vmem:[%s399] sm:$0xf] %vm572, 0.0
      $region40: #{attention_block_forward.3} parent=35 // pred_fallthru
        _
      %v574 = vld [vmem:[%s399] sm:$0xf]
      %v575 = vadd.f32 %v574, %v567
      %vm576 = vcmask 27648
      %577 = vst.msk [vmem:[%s399] sm:$0xf] %vm576, %v575
      %s578 = sadd.s32 %s24, %s25
      %s579 = smul.u32 2, %s578
      %p580 = scmp.lt.s32.totalorder %s23, 1
      %s581 = scalar_select %p580, %s23, 1
      %p582 = scmp.lt.s32.totalorder %s579, 1
      %s583 = scalar_select %p582, %s579, 1
      %s584 = smul.addr %s581, 2
      %s585 = sadd.s32 %s583, %s584
      %s586 = smul.addr %s585, 2
      %s587 = scalar_lea.vmem %s4, %s586
      %s588 = sadd.s32 %s24, %s25
      %s589 = smul.u32 2, %s588
      %p590 = scmp.lt.s32.totalorder %s23, 1
      %s591 = scalar_select %p590, %s23, 1
      %p592 = scmp.lt.s32.totalorder %s589, 1
      %s593 = scalar_select %p592, %s589, 1
      %s594 = smul.addr %s591, 2
      %s595 = sadd.s32 %s593, %s594
      %s596 = smul.addr %s595, 2
      %s597 = scalar_lea.vmem %s5, %s596
      %p598 = scmp.lt.s32.totalorder %s23, 1
      %s599 = scalar_select %p598, %s23, 1
      %p600 = scmp.lt.s32.totalorder %s24, 0
      %s601 = scalar_select %p600, %s24, 0
      %s602 = sadd.s32 %s601, %s599
      %s603 = smul.addr %s602, 4
      %s604 = scalar_lea.vmem %s6, %s603
      // Predicated region
      $region41: #{attention_block_forward.3} parent=35 // pred_check
        %p605 = pneg %p161
      $region42: #{attention_block_forward.3} parent=35 // pred_check_branch
        %607 = sbr.rel (%p605) target = $region44
      $region43: #{attention_block_forward.3} parent=35 // pred_region
        %s608 = sadd.s32 %s24, %s25
        %s609 = smul.u32 2, %s608
      $region44: #{attention_block_forward.3} parent=35 // pred_fallthru
        _
      // Predicated region
      $region45: #{attention_block_forward.3} parent=35 // pred_check
        %p610 = pneg %p191
      $region46: #{attention_block_forward.3} parent=35 // pred_check_branch
        %612 = sbr.rel (%p610) target = $region48
      $region47: #{attention_block_forward.3} parent=35 // pred_region
        %s613 = sadd.s32 %s24, %s25
        %s614 = smul.u32 2, %s613
      $region48: #{attention_block_forward.3} parent=35 // pred_fallthru
        _
      // Predicated region
      $region49: #{attention_block_forward.3} parent=35 // pred_check
        %p615 = pneg %p219
      $region50: #{attention_block_forward.3} parent=35 // pred_check_branch
        %617 = sbr.rel (%p615) target = $region52
      $region51: #{attention_block_forward.3} parent=35 // pred_region
        _
      $region52: #{attention_block_forward.3} parent=35 // pred_fallthru
        _
    $region36: #{attention_block_forward.3} parent=5 // pred_fallthru
      _
    %p618 = scmp.le.s32.totalorder 2, %s13
    // Predicated region
    $region53: #{attention_block_forward.3} parent=5 // pred_check
      %p619 = pneg %p618
    $region54: #{attention_block_forward.3} parent=5 // pred_check_branch
      %621 = sbr.rel (%p619) target = $region56
    $region55: #{attention_block_forward.3} parent=5 // pred_region
      %s622 = ssub.s32 %s13, 2
      // Predicated region
      $region57: #{attention_block_forward.3} parent=55 // pred_check
        %p623 = pneg %p167
      $region58: #{attention_block_forward.3} parent=55 // pred_check_branch
        %625 = sbr.rel (%p623) target = $region60
      $region59: #{attention_block_forward.3} parent=55 // pred_region
        %s626 = sadd.s32 %s27, %s28
        %s627 = smul.u32 2, %s626
        %p628 = scmp.lt.s32.totalorder %s26, 1
        %s629 = scalar_select %p628, %s26, 1
        %p630 = scmp.lt.s32.totalorder %s627, 1
        %s631 = scalar_select %p630, %s627, 1
        %s632 = smul.addr %s629, 2
        %s633 = sadd.s32 %s631, %s632
        %s634 = smul.addr %s633, 2
        %s635 = scalar_lea.vmem %s4, %s634
      $region60: #{attention_block_forward.3} parent=55 // pred_fallthru
        _
      // Predicated region
      $region61: #{attention_block_forward.3} parent=55 // pred_check
        %p636 = pneg %p197
      $region62: #{attention_block_forward.3} parent=55 // pred_check_branch
        %638 = sbr.rel (%p636) target = $region64
      $region63: #{attention_block_forward.3} parent=55 // pred_region
        %s639 = sadd.s32 %s27, %s28
        %s640 = smul.u32 2, %s639
        %p641 = scmp.lt.s32.totalorder %s26, 1
        %s642 = scalar_select %p641, %s26, 1
        %p643 = scmp.lt.s32.totalorder %s640, 1
        %s644 = scalar_select %p643, %s640, 1
        %s645 = smul.addr %s642, 2
        %s646 = sadd.s32 %s644, %s645
        %s647 = smul.addr %s646, 2
        %s648 = scalar_lea.vmem %s5, %s647
      $region64: #{attention_block_forward.3} parent=55 // pred_fallthru
        _
      // Predicated region
      $region65: #{attention_block_forward.3} parent=55 // pred_check
        %p649 = pneg %p225
      $region66: #{attention_block_forward.3} parent=55 // pred_check_branch
        %651 = sbr.rel (%p649) target = $region68
      $region67: #{attention_block_forward.3} parent=55 // pred_region
        %p652 = scmp.lt.s32.totalorder %s26, 1
        %s653 = scalar_select %p652, %s26, 1
        %p654 = scmp.lt.s32.totalorder %s27, 0
        %s655 = scalar_select %p654, %s27, 0
        %s656 = sadd.s32 %s655, %s653
        %s657 = smul.addr %s656, 4
        %s658 = scalar_lea.vmem %s6, %s657
      $region68: #{attention_block_forward.3} parent=55 // pred_fallthru
        _
    $region56: #{attention_block_forward.3} parent=5 // pred_fallthru
      _
  $region6: #{attention_block_forward.3} parent=0 // loop_footer
    %s17 = sadd.s32 1, %s13
  $region7: #{attention_block_forward.3} parent=0 // loop_footer_branch
    %12 = sbr.rel target = $region3
  $region8: #{attention_block_forward.3} parent=0 // loop_exit
    _

// kernel: attention_block_forward.5
$region0: #{attention_block_forward.5}
  #allocation0 [shape = 'u32[]', space=smem, size = 0x4, offset = 0x4, fixed_abs, tag = 'smem constant byte address 0x4 - core index']
  #allocation1 [shape = 'u32[144,128]{1,0:T(1,128)}', space=vmem, size = 0x12000, scoped, tag = 'internal scratch']
  %s0 = inlined_call_operand.vmem [shape: f32[2], index: 0, kind: input, shape index: {}]
  %s1 = inlined_call_operand.vmem [shape: f32[2,8,256], index: 1, kind: input, shape index: {}]
  %s2 = inlined_call_operand.vmem [shape: f32[2,1,256], index: 2, kind: input, shape index: {}]
  %s3 = inlined_call_operand.vmem [shape: f32[2,8,256], index: 3, kind: output, shape index: {}]
  %s4 = sld [smem:[#allocation0]]
  $region49: #{attention_block_forward.5} parent=0
    _
  %s6 = ssub.s32 1, %s4
  %s7 = scalar_select 0, %s6, %s4
  $region1: #{attention_block_forward.5} parent=0
    #allocation2 [shape = 'u8[512]{0}', space=smem, size = 0x200, scoped, tag = 'input window, operand 0, single buffered']
    #allocation3 [shape = 's32[2]{0}', space=sflag, size = 0x8, scoped, tag = 'scoped memory for attention_block_forward.5']
    %8 = vsyncpa [#allocation3], 0
    loop: start=0, step=1, limit=4
    $region2: #{attention_block_forward.5} parent=1 // loop_pre_header
      _
    $region3: #{attention_block_forward.5} parent=1 // loop_header
      %s10 = sphi 0, %s14
      %p11 = scmp.ge.s32.totalorder %s10, 4
      %s17 = sphi 0, %s29
      %s18 = sphi 0, %s25
      %s19 = sphi 0, %s17
      %s20 = sphi 0, %s18
      %s21 = sphi 0, %s19
      %s22 = sphi 0, %s20
      %s30 = sphi 0, %s30
      %s32 = sphi 0, %s30
      %s33 = sphi 0, %s32
      %s47 = sphi 0, %s33
      %s55 = sphi 0, %s57
      %s58 = sphi 0, %s55
      %s59 = sphi 0, %s58
      %s75 = sphi 0, %s59
      %s83 = sphi 0, %s85
      %s86 = sphi 0, %s83
      %s87 = sphi 0, %s86
      %s103 = sphi 0, %s87
      %s111 = sphi 0, %s113
      %s114 = sphi 0, %s111
      %s115 = sphi 0, %s114
      %s131 = sphi 0, %s115
    $region4: #{attention_block_forward.5} parent=1 // loop_header_branch
      %13 = sbr.rel (%p11) target = $region8
    $region5: #{attention_block_forward.5} parent=1 // loop_body
      %s15 = ssub.s32 %s10, 1
      %s16 = ssub.s32 %s10, 2
      %s23 = sadd.s32 1, %s18
      %p24 = scmp.ge.s32.totalorder %s23, 1
      %s25 = scalar_select %p24, 0, %s23
      %s26 = sadd.s32 1, %s17
      %s27 = scalar_select %p24, %s26, %s17
      %p28 = scmp.ge.s32.totalorder %s27, 2
      %s29 = scalar_select %p28, 0, %s27
      %s31 = sadd.s32 %s30, 1
      %p34 = scmp.eq.s32.totalorder %s10, 1
      %p35 = scmp.ne.s32.totalorder %s30, %s32
      %p36 = scmp.eq.s32.totalorder %s10, 0
      %p37 = por %p35, %p36
      %p38 = scmp.ne.s32.totalorder %s30, %s32
      %p39 = scmp.eq.s32.totalorder %s15, 1
      %p40 = por %p38, %p39
      %p41 = scmp.ne.s32.totalorder %s32, %s33
      %p42 = scmp.eq.s32.totalorder %s15, 0
      %p43 = por %p41, %p42
      %p44 = scmp.ne.s32.totalorder %s32, %s33
      %p45 = scmp.eq.s32.totalorder %s16, 1
      %p46 = por %p44, %p45
      %p48 = scmp.ne.s32.totalorder %s33, %s47
      %p49 = scmp.eq.s32.totalorder %s16, 0
      %p50 = por %p48, %p49
      %s51 = ssub.s32 %s17, %s29
      %s52 = ssub.s32 %s18, %s25
      %s53 = sor.u32 %s51, %s52
      %p54 = scmp.eq.s32.totalorder %s53, 0
      %s56 = sadd.s32 %s55, 1
      %s57 = scalar_select %p54, %s55, %s56
      %p60 = pneg %p54
      %p61 = scmp.eq.s32.totalorder %s10, 1
      %p62 = por %p60, %p61
      %p63 = scmp.ne.s32.totalorder %s55, %s58
      %p64 = scmp.eq.s32.totalorder %s10, 0
      %p65 = por %p63, %p64
      %p66 = scmp.ne.s32.totalorder %s55, %s58
      %p67 = scmp.eq.s32.totalorder %s15, 1
      %p68 = por %p66, %p67
      %p69 = scmp.ne.s32.totalorder %s58, %s59
      %p70 = scmp.eq.s32.totalorder %s15, 0
      %p71 = por %p69, %p70
      %p72 = scmp.ne.s32.totalorder %s58, %s59
      %p73 = scmp.eq.s32.totalorder %s16, 1
      %p74 = por %p72, %p73
      %p76 = scmp.ne.s32.totalorder %s59, %s75
      %p77 = scmp.eq.s32.totalorder %s16, 0
      %p78 = por %p76, %p77
      %s79 = ssub.s32 %s17, %s29
      %s80 = ssub.s32 %s18, %s25
      %s81 = sor.u32 %s79, %s80
      %p82 = scmp.eq.s32.totalorder %s81, 0
      %s84 = sadd.s32 %s83, 1
      %s85 = scalar_select %p82, %s83, %s84
      %p88 = pneg %p82
      %p89 = scmp.eq.s32.totalorder %s10, 1
      %p90 = por %p88, %p89
      %p91 = scmp.ne.s32.totalorder %s83, %s86
      %p92 = scmp.eq.s32.totalorder %s10, 0
      %p93 = por %p91, %p92
      %p94 = scmp.ne.s32.totalorder %s83, %s86
      %p95 = scmp.eq.s32.totalorder %s15, 1
      %p96 = por %p94, %p95
      %p97 = scmp.ne.s32.totalorder %s86, %s87
      %p98 = scmp.eq.s32.totalorder %s15, 0
      %p99 = por %p97, %p98
      %p100 = scmp.ne.s32.totalorder %s86, %s87
      %p101 = scmp.eq.s32.totalorder %s16, 1
      %p102 = por %p100, %p101
      %p104 = scmp.ne.s32.totalorder %s87, %s103
      %p105 = scmp.eq.s32.totalorder %s16, 0
      %p106 = por %p104, %p105
      %s107 = ssub.s32 %s17, %s29
      %s108 = ssub.s32 %s18, %s25
      %s109 = sor.u32 %s107, %s108
      %p110 = scmp.eq.s32.totalorder %s109, 0
      %s112 = sadd.s32 %s111, 1
      %s113 = scalar_select %p110, %s111, %s112
      %p116 = pneg %p110
      %p117 = scmp.eq.s32.totalorder %s10, 1
      %p118 = por %p116, %p117
      %p119 = scmp.ne.s32.totalorder %s111, %s114
      %p120 = scmp.eq.s32.totalorder %s10, 0
      %p121 = por %p119, %p120
      %p122 = scmp.ne.s32.totalorder %s111, %s114
      %p123 = scmp.eq.s32.totalorder %s15, 1
      %p124 = por %p122, %p123
      %p125 = scmp.ne.s32.totalorder %s114, %s115
      %p126 = scmp.eq.s32.totalorder %s15, 0
      %p127 = por %p125, %p126
      %p128 = scmp.ne.s32.totalorder %s114, %s115
      %p129 = scmp.eq.s32.totalorder %s16, 1
      %p130 = por %p128, %p129
      %p132 = scmp.ne.s32.totalorder %s115, %s131
      %p133 = scmp.eq.s32.totalorder %s16, 0
      %p134 = por %p132, %p133
      %p135 = scmp.le.s32.totalorder 1, %s10
      %p136 = scmp.lt.s32.totalorder %s10, 3
      %p137 = pnand %p135, %p136
      %p138 = pneg %p137
      // Predicated region
      $region9: #{attention_block_forward.5} parent=5 // pred_check
        _
      $region10: #{attention_block_forward.5} parent=5 // pred_check_branch
        %140 = sbr.rel (%p137) target = $region12
      $region11: #{attention_block_forward.5} parent=5 // pred_region
        %s141 = ssub.s32 %s10, 1
        // Predicated region
        $region13: #{attention_block_forward.5} parent=11 // pred_check
          %p142 = pneg %p43
        $region14: #{attention_block_forward.5} parent=11 // pred_check_branch
          %144 = sbr.rel (%p142) target = $region16
        $region15: #{attention_block_forward.5} parent=11 // pred_region
          %s146 = ssub.s32 16, 16
          %147 = vsyncadd [#allocation3], %s146
          %s149 = sshll.u32 %s0, 4
          %s150 = int_to_ptr.vmem [resolvable:$true] %s149
          %152 = dma.vmem_to_smem %s150, 16, [#allocation2], [#allocation3]
        $region16: #{attention_block_forward.5} parent=11 // pred_fallthru
          _
      $region12: #{attention_block_forward.5} parent=5 // pred_fallthru
        _
      %p153 = scmp.lt.s32.totalorder %s10, 2
      // Predicated region
      $region17: #{attention_block_forward.5} parent=5 // pred_check
        %p154 = pneg %p153
      $region18: #{attention_block_forward.5} parent=5 // pred_check_branch
        %156 = sbr.rel (%p154) target = $region20
      $region19: #{attention_block_forward.5} parent=5 // pred_region
        // Predicated region
        $region21: #{attention_block_forward.5} parent=19 // pred_check
          %p157 = pneg %p65
        $region22: #{attention_block_forward.5} parent=19 // pred_check_branch
          %159 = sbr.rel (%p157) target = $region24
        $region23: #{attention_block_forward.5} parent=19 // pred_region
          %s160 = smul.u32 2, %s18
          %p161 = scmp.lt.s32.totalorder %s17, 1
          %s162 = scalar_select %p161, %s17, 1
          %p163 = scmp.lt.s32.totalorder %s160, 1
          %s164 = scalar_select %p163, %s160, 1
          %s165 = smul.addr %s162, 2
          %s166 = sadd.s32 %s164, %s165
          %s167 = smul.addr %s166, 8
          %s168 = scalar_lea.vmem %s1, %s167
          %s169 = smul.u32 2, %s18
        $region24: #{attention_block_forward.5} parent=19 // pred_fallthru
          _
        // Predicated region
        $region25: #{attention_block_forward.5} parent=19 // pred_check
          %p170 = pneg %p93
        $region26: #{attention_block_forward.5} parent=19 // pred_check_branch
          %172 = sbr.rel (%p170) target = $region28
        $region27: #{attention_block_forward.5} parent=19 // pred_region
          %s173 = smul.u32 2, %s18
          %p174 = scmp.lt.s32.totalorder %s17, 1
          %s175 = scalar_select %p174, %s17, 1
          %p176 = scmp.lt.s32.totalorder %s173, 1
          %s177 = scalar_select %p176, %s173, 1
          %s178 = smul.addr %s175, 2
          %s179 = sadd.s32 %s177, %s178
          %s180 = scalar_lea.vmem %s2, %s179
          %s181 = smul.u32 2, %s18
        $region28: #{attention_block_forward.5} parent=19 // pred_fallthru
          _
      $region20: #{attention_block_forward.5} parent=5 // pred_fallthru
        _
      %p182 = scmp.le.s32.totalorder 1, %s10
      %p183 = scmp.lt.s32.totalorder %s10, 3
      %p184 = pnand %p182, %p183
      %p185 = pneg %p184
      // Predicated region
      $region29: #{attention_block_forward.5} parent=5 // pred_check
        _
      $region30: #{attention_block_forward.5} parent=5 // pred_check_branch
        %187 = sbr.rel (%p184) target = $region32
      $region31: #{attention_block_forward.5} parent=5 // pred_region
        %s188 = ssub.s32 %s10, 1
        // Predicated region
        $region33: #{attention_block_forward.5} parent=31 // pred_check
          %p189 = pneg %p43
        $region34: #{attention_block_forward.5} parent=31 // pred_check_branch
          %191 = sbr.rel (%p189) target = $region36
        $region35: #{attention_block_forward.5} parent=31 // pred_region
          %192 = dma.done [#allocation3], 16
        $region36: #{attention_block_forward.5} parent=31 // pred_fallthru
          _
        %193 = sfence
        %p194 = pneg %p43
        %p195 = pneg %p40
        %s196 = smul.u32 2, %s20
        %p197 = scmp.lt.s32.totalorder %s19, 1
        %s198 = scalar_select %p197, %s19, 1
        %p199 = scmp.lt.s32.totalorder %s196, 1
        %s200 = scalar_select %p199, %s196, 1
        %s201 = smul.addr %s198, 2
        %s202 = sadd.s32 %s200, %s201
        %s203 = smul.addr %s202, 8
        %s204 = scalar_lea.vmem %s1, %s203
        %p205 = pneg %p71
        %p206 = pneg %p68
        %s207 = smul.u32 2, %s20
        %p208 = scmp.lt.s32.totalorder %s19, 1
        %s209 = scalar_select %p208, %s19, 1
        %p210 = scmp.lt.s32.totalorder %s207, 1
        %s211 = scalar_select %p210, %s207, 1
        %s212 = smul.addr %s209, 2
        %s213 = sadd.s32 %s211, %s212
        %s214 = scalar_lea.vmem %s2, %s213
        %p215 = pneg %p99
        %p216 = pneg %p96
        %p217 = pneg %p127
        %p218 = pneg %p124
        %s219 = smul.u32 2, %s20
        %p220 = scmp.lt.s32.totalorder %s19, 1
        %s221 = scalar_select %p220, %s19, 1
        %p222 = scmp.lt.s32.totalorder %s219, 1
        %s223 = scalar_select %p222, %s219, 1
        %s224 = smul.addr %s221, 2
        %s225 = sadd.s32 %s223, %s224
        %s226 = smul.addr %s225, 8
        %s227 = scalar_lea.vmem %s3, %s226
        %s228 = smul.u32 2, %s20
        %p229 = scmp.lt.s32.totalorder %s19, 1
        %s230 = scalar_select %p229, %s19, 1
        %p231 = scmp.lt.s32.totalorder %s228, 1
        %s232 = scalar_select %p231, %s228, 1
        %s233 = smul.addr %s230, 2
        %s234 = sadd.s32 %s232, %s233
        %s235 = smul.addr %s234, 8
        %s236 = scalar_lea.vmem %s1, %s235
        %s237 = smul.u32 2, %s20
        %s238 = smul.u32 2, %s20
        %p239 = scmp.lt.s32.totalorder %s19, 1
        %s240 = scalar_select %p239, %s19, 1
        %p241 = scmp.lt.s32.totalorder %s238, 1
        %s242 = scalar_select %p241, %s238, 1
        %s243 = smul.addr %s240, 2
        %s244 = sadd.s32 %s242, %s243
        %s245 = scalar_lea.vmem %s2, %s244
        %s246 = smul.u32 2, %s20
        %s247 = smul.u32 2, %s20
        %p248 = scmp.lt.s32.totalorder %s19, 1
        %s249 = scalar_select %p248, %s19, 1
        %p250 = scmp.lt.s32.totalorder %s247, 1
        %s251 = scalar_select %p250, %s247, 1
        %s252 = smul.addr %s249, 2
        %s253 = sadd.s32 %s251, %s252
        %s254 = smul.addr %s253, 8
        %s255 = scalar_lea.vmem %s3, %s254
        %s256 = smul.u32 2, %s20
        %s257 = sld [smem:[#allocation2]]
        %s258 = sld [smem:[#allocation2 + $0x1]]
        %v259 = vld [vmem:[%s245] sm:$0x3]
        %v260 = vstv %s257
        %v261 = vmul.f32 %v259, %v260
        %v262 = vstv %s258
        %v263 = vadd.f32 %v261, %v262
        %v264 = vsub.f32 0.0, %v263
        %v265 = vmul.f32 %v264, 1.442695
        %v266 = vpow.pop %v265
        %v267 = vadd.f32 %v266, 1.0
        %v268 = vrcp.pop %v267
        %v269 = vld [vmem:[%s236] sm:$0xff]
        %v270 = vld [vmem:[%s236 + $0x8] sm:$0xff]
        %v272 = vlaneseq
        %v273 = vshrl.u32 %v272, 7
        %v274 = vsub.s32 0, %v273
        %v275 = vrot.slane %v268, %v274
        %v276 = vlaneseq
        %v277 = vshrl.u32 %v276, 7
        %v278 = vsub.s32 1, %v277
        %v279 = vrot.slane %v268, %v278
        %v282 = vmul.f32 %v269, %v275
        %v283 = vmul.f32 %v270, %v279
        %284 = vst [vmem:[%s255] sm:$0xff] %v282
        %285 = vst [vmem:[%s255 + $0x8] sm:$0xff] %v283
        %s286 = smul.u32 2, %s20
        %p287 = scmp.lt.s32.totalorder %s19, 1
        %s288 = scalar_select %p287, %s19, 1
        %p289 = scmp.lt.s32.totalorder %s286, 1
        %s290 = scalar_select %p289, %s286, 1
        %s291 = smul.addr %s288, 2
        %s292 = sadd.s32 %s290, %s291
        %s293 = smul.addr %s292, 8
        %s294 = scalar_lea.vmem %s3, %s293
        // Predicated region
        $region37: #{attention_block_forward.5} parent=31 // pred_check
          %p295 = pneg %p124
        $region38: #{attention_block_forward.5} parent=31 // pred_check_branch
          %297 = sbr.rel (%p295) target = $region40
        $region39: #{attention_block_forward.5} parent=31 // pred_region
          %s298 = smul.u32 2, %s20
        $region40: #{attention_block_forward.5} parent=31 // pred_fallthru
          _
      $region32: #{attention_block_forward.5} parent=5 // pred_fallthru
        _
      %p299 = scmp.le.s32.totalorder 2, %s10
      // Predicated region
      $region41: #{attention_block_forward.5} parent=5 // pred_check
        %p300 = pneg %p299
      $region42: #{attention_block_forward.5} parent=5 // pred_check_branch
        %302 = sbr.rel (%p300) target = $region44
      $region43: #{attention_block_forward.5} parent=5 // pred_region
        %s303 = ssub.s32 %s10, 2
        // Predicated region
        $region45: #{attention_block_forward.5} parent=43 // pred_check
          %p304 = pneg %p130
        $region46: #{attention_block_forward.5} parent=43 // pred_check_branch
          %306 = sbr.rel (%p304) target = $region48
        $region47: #{attention_block_forward.5} parent=43 // pred_region
          %s307 = smul.u32 2, %s22
          %p308 = scmp.lt.s32.totalorder %s21, 1
          %s309 = scalar_select %p308, %s21, 1
          %p310 = scmp.lt.s32.totalorder %s307, 1
          %s311 = scalar_select %p310, %s307, 1
          %s312 = smul.addr %s309, 2
          %s313 = sadd.s32 %s311, %s312
          %s314 = smul.addr %s313, 8
          %s315 = scalar_lea.vmem %s3, %s314
        $region48: #{attention_block_forward.5} parent=43 // pred_fallthru
          _
      $region44: #{attention_block_forward.5} parent=5 // pred_fallthru
        _
    $region6: #{attention_block_forward.5} parent=1 // loop_footer
      %s14 = sadd.s32 1, %s10
    $region7: #{attention_block_forward.5} parent=1 // loop_footer_branch
      %9 = sbr.rel target = $region3
    $region8: #{attention_block_forward.5} parent=1 // loop_exit
      _
    %316 = vsyncpa [#allocation3], 1
    %s317 = scalar_lea.sflag [#allocation3], 1
    %318 = vsyncpa %s317, 1

</llo_original>
